<compile_context>
chip_gen: v7x
topology: tpu7x:2x2x1
jax: 0.10.0
libtpu: 0.0.40
codegen_flags: <defaults>
</compile_context>

<pallas_src>
import functools

import jax
import jax.numpy as jnp
from jax.experimental import pallas as pl
from jax.experimental.pallas import tpu as pltpu

LANE = 128
SUBLANE = 8


def _round_up(x, m):
    return ((x + m - 1) // m) * m


def _device_kind():
    try:
        return jax.devices()[0].device_kind.lower()
    except Exception:
        return ""


def _num_tensorcores():
    # v7x exposes 2 TensorCores to a single Pallas grid; v5e/v6e have 1.
    return 2 if "v7" in _device_kind() else 1


def _leaky(x):
    # nn.LeakyReLU default negative_slope = 0.01
    return jnp.where(x > 0, x, 0.01 * x)


def _mm(x, w):
    # MXU matmul; operands in the weight dtype (f32 or bf16), accumulate in f32.
    return jnp.dot(x.astype(w.dtype), w, preferred_element_type=jnp.float32)


def icm_kernel(
    # activations (blocked over batch)
    state_ref, next_state_ref, a_contrib_ref,
    # encoder params (resident in VMEM)
    ew1_ref, eb1_ref, ew2_ref, eb2_ref, ew3_ref, eb3_ref,
    # forward_model params (embedding + fb1 already folded into a_contrib)
    fw1s_ref, fw2_ref, fb2_ref, fw3_ref, fb3_ref,
    # inverse_model params (last layer zero-padded to a full lane width)
    iw1a_ref, iw1b_ref, ib1_ref, iw2_ref, ib2_ref, iw3_ref, ib3_ref,
    # single lane-dense output slab: [phi_s_next | hat_phi_s_next | hat_a_padded]
    out_ref,
):
    tb = state_ref.shape[0]          # static block rows
    s_pad = ew3_ref.shape[1]         # lane-padded latent width (static)

    # Hoist all weight / bias loads to kernel top (read each resident ref once).
    ew1, eb1 = ew1_ref[...], eb1_ref[...]
    ew2, eb2 = ew2_ref[...], eb2_ref[...]
    ew3, eb3 = ew3_ref[...], eb3_ref[...]
    fw1s = fw1s_ref[...]
    fw2, fb2 = fw2_ref[...], fb2_ref[...]
    fw3, fb3 = fw3_ref[...], fb3_ref[...]
    iw1a, iw1b, ib1 = iw1a_ref[...], iw1b_ref[...], ib1_ref[...]
    iw2, ib2 = iw2_ref[...], ib2_ref[...]
    iw3, ib3 = iw3_ref[...], ib3_ref[...]

    def affine(acc, b):
        # f32 accumulator -> elementwise dtype (f32, or bf16 on v6e/v7x) + bias.
        return acc.astype(b.dtype) + b

    # Fused encoder: both state and next_state through ONE matmul chain.
    x = jnp.concatenate([state_ref[...], next_state_ref[...]], axis=0)   # (2*tb, D)
    h = _leaky(affine(_mm(x, ew1), eb1))
    h = _leaky(affine(_mm(h, ew2), eb2))
    phi = affine(_mm(h, ew3), eb3)                                       # (2*tb, s_pad)
    phi_s, phi_s_next = phi[:tb], phi[tb:]

    # forward_model( cat(a_rep, phi_s) ); embedding-lookup matmul + fb1 folded into
    # the per-row a_contrib activation.
    h = _leaky(affine(_mm(phi_s, fw1s), a_contrib_ref[...]))
    h = _leaky(affine(_mm(h, fw2), fb2))
    hat_phi_s_next = affine(_mm(h, fw3), fb3)

    # inverse_model( cat(phi_s, phi_s_next) )
    g = _leaky(affine(_mm(phi_s, iw1a) + _mm(phi_s_next, iw1b), ib1))
    g = _leaky(affine(_mm(g, iw2), ib2))
    hat_a = affine(_mm(g, iw3), ib3)

    # Lane-dense, unmasked stores (all segment widths are multiples of 128).
    out_ref[:, :s_pad] = phi_s_next.astype(out_ref.dtype)
    out_ref[:, s_pad:2 * s_pad] = hat_phi_s_next.astype(out_ref.dtype)
    out_ref[:, 2 * s_pad:] = hat_a.astype(out_ref.dtype)


def make_params(key, state_dim, action_dim, hidden_dim, s_latent_dim, a_latent_dim):
    """Deterministic synthetic params; Linear weights stored (in, out)."""
    def linear(k, fan_in, fan_out):
        kw, kb = jax.random.split(k)
        scale = 1.0 / jnp.sqrt(jnp.float32(fan_in))
        w = jax.random.uniform(kw, (fan_in, fan_out), jnp.float32, -scale, scale)
        b = jax.random.uniform(kb, (1, fan_out), jnp.float32, -scale, scale)
        return w, b

    keys = jax.random.split(key, 11)
    p = {}
    # encoder: state_dim -> hidden -> hidden -> s_latent
    p["ew1"], p["eb1"] = linear(keys[0], state_dim, hidden_dim)
    p["ew2"], p["eb2"] = linear(keys[1], hidden_dim, hidden_dim)
    p["ew3"], p["eb3"] = linear(keys[2], hidden_dim, s_latent_dim)
    # action embedding: (action_dim, a_latent_dim)
    p["emb"] = jax.random.normal(keys[3], (action_dim, a_latent_dim), jnp.float32)
    # forward_model: (a_latent + s_latent) -> hidden -> hidden -> s_latent
    fw1, p["fb1"] = linear(keys[4], a_latent_dim + s_latent_dim, hidden_dim)
    p["fw1a"], p["fw1s"] = fw1[:a_latent_dim], fw1[a_latent_dim:]
    p["fw2"], p["fb2"] = linear(keys[5], hidden_dim, hidden_dim)
    p["fw3"], p["fb3"] = linear(keys[6], hidden_dim, s_latent_dim)
    # inverse_model: 2*s_latent -> hidden -> hidden -> action_dim
    iw1, p["ib1"] = linear(keys[7], 2 * s_latent_dim, hidden_dim)
    p["iw1a"], p["iw1b"] = iw1[:s_latent_dim], iw1[s_latent_dim:]
    p["iw2"], p["ib2"] = linear(keys[8], hidden_dim, hidden_dim)
    p["iw3"], p["ib3"] = linear(keys[9], hidden_dim, action_dim)
    return p


def prepare_params(params, action_dim, *, use_bf16=False, bf16_elementwise=None):
    """One-time packaging of the module parameters for the kernel.

    * weights -> MXU-operand dtype (optionally bf16), biases -> elementwise dtype
      (bf16 only on generations with a bf16 VPU, i.e. not v5e).
    * action embedding folded into the forward-model first layer:
        afw1b = emb @ fw1[:a_latent] + fb1  (the wrapper gathers afw1b[action]).
    * latent / action output dims zero-padded to 128-lane multiples so all matmuls
      and output-slab stores stay lane-dense and unmasked (mathematically exact).
    """
    if bf16_elementwise is None:
        bf16_elementwise = use_bf16 and ("v5" not in _device_kind())
    w_dt = jnp.bfloat16 if use_bf16 else jnp.float32
    e_dt = jnp.bfloat16 if bf16_elementwise else jnp.float32

    s_latent = params["ew3"].shape[1]
    s_pad = _round_up(s_latent, LANE)
    a_pad = _round_up(action_dim, LANE)
    ds = s_pad - s_latent
    da = a_pad - action_dim

    def pad_cols(x, extra):
        return jnp.pad(x, ((0, 0), (0, extra))) if extra else x

    def pad_rows(x, extra):
        return jnp.pad(x, ((0, extra), (0, 0))) if extra else x

    afw1b = jnp.dot(params["emb"], params["fw1a"],
                    precision=jax.lax.Precision.HIGHEST) + params["fb1"]

    return dict(
        ew1=params["ew1"].astype(w_dt), eb1=params["eb1"].astype(e_dt),
        ew2=params["ew2"].astype(w_dt), eb2=params["eb2"].astype(e_dt),
        ew3=pad_cols(params["ew3"], ds).astype(w_dt),
        eb3=pad_cols(params["eb3"], ds).astype(e_dt),
        afw1b=afw1b.astype(e_dt),                              # (action_dim, hidden)
        fw1s=pad_rows(params["fw1s"], ds).astype(w_dt),
        fw2=params["fw2"].astype(w_dt), fb2=params["fb2"].astype(e_dt),
        fw3=pad_cols(params["fw3"], ds).astype(w_dt),
        fb3=pad_cols(params["fb3"], ds).astype(e_dt),
        iw1a=pad_rows(params["iw1a"], ds).astype(w_dt),
        iw1b=pad_rows(params["iw1b"], ds).astype(w_dt),
        ib1=params["ib1"].astype(e_dt),
        iw2=params["iw2"].astype(w_dt), ib2=params["ib2"].astype(e_dt),
        iw3=pad_cols(params["iw3"], da).astype(w_dt),
        ib3=pad_cols(params["ib3"], da).astype(e_dt),
    )


@functools.partial(jax.jit,
                   static_argnames=("action_dim", "s_latent", "block_rows"))
def icm_forward(state, next_state, action, prepared, *,
                action_dim, s_latent, block_rows=None):
    batch, state_dim = state.shape
    hidden = prepared["ew1"].shape[1]
    s_pad = prepared["ew3"].shape[1]
    a_pad = prepared["iw3"].shape[1]
    out_cols = 2 * s_pad + a_pad
    w_dt = prepared["ew1"].dtype

    # Per-row action contribution to forward-model layer 1 (embedding + fb1 folded).
    a_contrib = prepared["afw1b"][action]                      # (batch, hidden)

    # Grid: one step per TensorCore.
    #  - v5e / v6e (single TC): tb = batch, grid=(1,)  -> no serial-loop overhead.
    #  - v7x (2 TCs): tb = batch/2, grid=(2,), "parallel" shards blocks across cores.
    if block_rows is None:
        n_tc = _num_tensorcores()
        tb = batch
        if n_tc > 1 and batch % n_tc == 0 and (batch // n_tc) % SUBLANE == 0:
            tb = batch // n_tc
    else:
        tb = min(block_rows, batch)
    grid = (pl.cdiv(batch, tb),)

    def act_spec(cols):
        return pl.BlockSpec((tb, cols), lambda i: (i, 0))

    def resident(arr):
        # Constant index_map -> weight stays VMEM-resident across grid steps.
        return pl.BlockSpec(arr.shape, lambda i: (0, 0))

    weight_names = ("ew1", "eb1", "ew2", "eb2", "ew3", "eb3",
                    "fw1s", "fw2", "fb2", "fw3", "fb3",
                    "iw1a", "iw1b", "ib1", "iw2", "ib2", "iw3", "ib3")
    weights = [prepared[n] for n in weight_names]

    args = [state.astype(w_dt), next_state.astype(w_dt), a_contrib] + weights
    in_specs = [act_spec(state_dim), act_spec(state_dim), act_spec(hidden)] \
        + [resident(w) for w in weights]

    # Advisory cost estimate for XLA's scheduler.
    H, S, A = hidden, s_pad, a_pad
    flops = 2 * batch * (
        2 * (state_dim * H + H * H + H * S)    # fused encoder (2 rows / sample)
        + (S * H + H * H + H * S)              # forward model
        + (2 * S * H + H * H + H * A))         # inverse model
    bytes_accessed = sum(int(a.size) * a.dtype.itemsize for a in args) \
        + batch * out_cols * 4
    cost = pl.CostEstimate(flops=flops, transcendentals=0,
                           bytes_accessed=bytes_accessed)

    out = pl.pallas_call(
        icm_kernel,
        out_shape=jax.ShapeDtypeStruct((batch, out_cols), jnp.float32),
        grid=grid,
        in_specs=in_specs,
        out_specs=pl.BlockSpec((tb, out_cols), lambda i: (i, 0)),
        compiler_params=pltpu.CompilerParams(
            dimension_semantics=("parallel",)),
        cost_estimate=cost,
    )(*args)

    phi_s_next = out[:, :s_latent]
    hat_phi_s_next = out[:, s_pad:s_pad + s_latent]
    hat_a = out[:, 2 * s_pad:2 * s_pad + action_dim]
    return phi_s_next, hat_phi_s_next, hat_a


def icm_forward_ref(state, next_state, action, params, action_dim):
    """Pure-JAX reference mirroring the PyTorch module (f32 throughout)."""
    def leaky(x):
        return jnp.where(x > 0, x, 0.01 * x)

    def enc(x):
        h = leaky(x @ params["ew1"] + params["eb1"])
        h = leaky(h @ params["ew2"] + params["eb2"])
        return h @ params["ew3"] + params["eb3"]

    phi_s = enc(state)
    phi_s_next = enc(next_state)
    a_rep = params["emb"][action]
    h = leaky(a_rep @ params["fw1a"] + phi_s @ params["fw1s"] + params["fb1"])
    h = leaky(h @ params["fw2"] + params["fb2"])
    hat_phi = h @ params["fw3"] + params["fb3"]
    g = leaky(phi_s @ params["iw1a"] + phi_s_next @ params["iw1b"] + params["ib1"])
    g = leaky(g @ params["iw2"] + params["ib2"])
    hat_a = g @ params["iw3"] + params["ib3"]
    return phi_s_next, hat_phi, hat_a


if __name__ == "__main__":
    # forward signature: state/next_state (batch, state_dim); action (batch,)
    # hidden/s_latent/a_latent use the module's defaults (128) -> lane-aligned.
    batch, state_dim, action_dim = 64, 16, 8
    hidden_dim = s_latent_dim = a_latent_dim = 128

    key = jax.random.PRNGKey(0)
    k_p, k_s, k_ns, k_a = jax.random.split(key, 4)
    params = make_params(k_p, state_dim, action_dim, hidden_dim,
                         s_latent_dim, a_latent_dim)

    state = jax.random.normal(k_s, (batch, state_dim), jnp.float32)
    next_state = jax.random.normal(k_ns, (batch, state_dim), jnp.float32)
    action = jax.random.randint(k_a, (batch,), 0, action_dim, jnp.int32)

    ref = icm_forward_ref(state, next_state, action, params, action_dim)

    # f32 MXU-operand path: tight agreement with the pure-JAX reference.
    prep_f32 = prepare_params(params, action_dim, use_bf16=False)
    got_f32 = jax.block_until_ready(
        icm_forward(state, next_state, action, prep_f32,
                    action_dim=action_dim, s_latent=s_latent_dim))
    for g, w in zip(got_f32, ref):
        assert g.shape == w.shape and g.dtype == w.dtype
        assert jnp.allclose(g, w, atol=2e-3, rtol=2e-3), \
            float(jnp.max(jnp.abs(g - w)))

    # bf16 MXU-operand path (recommended perf config on all generations);
    # elementwise runs in bf16 only where the VPU supports it. Loose tolerance.
    prep_bf16 = prepare_params(params, action_dim, use_bf16=True)
    got_bf16 = jax.block_until_ready(
        icm_forward(state, next_state, action, prep_bf16,
                    action_dim=action_dim, s_latent=s_latent_dim))
    for g, w in zip(got_bf16, ref):
        assert g.shape == w.shape
        assert jnp.allclose(g, w, atol=1e-1, rtol=1e-1), \
            float(jnp.max(jnp.abs(g - w)))

    print("KERNEL_OK")
</pallas_src>

<mosaic_0001>
module attributes {stable_mosaic.version = 11 : i64} {
  func.func @icm_kernel(%arg0: i32, %arg1: memref<64x16xf32, #tpu.memory_space<vmem>>, %arg2: memref<64x16xf32, #tpu.memory_space<vmem>>, %arg3: memref<64x128xf32, #tpu.memory_space<vmem>>, %arg4: memref<16x128xf32, #tpu.memory_space<vmem>>, %arg5: memref<1x128xf32, #tpu.memory_space<vmem>>, %arg6: memref<128x128xf32, #tpu.memory_space<vmem>>, %arg7: memref<1x128xf32, #tpu.memory_space<vmem>>, %arg8: memref<128x128xf32, #tpu.memory_space<vmem>>, %arg9: memref<1x128xf32, #tpu.memory_space<vmem>>, %arg10: memref<128x128xf32, #tpu.memory_space<vmem>>, %arg11: memref<128x128xf32, #tpu.memory_space<vmem>>, %arg12: memref<1x128xf32, #tpu.memory_space<vmem>>, %arg13: memref<128x128xf32, #tpu.memory_space<vmem>>, %arg14: memref<1x128xf32, #tpu.memory_space<vmem>>, %arg15: memref<128x128xf32, #tpu.memory_space<vmem>>, %arg16: memref<128x128xf32, #tpu.memory_space<vmem>>, %arg17: memref<1x128xf32, #tpu.memory_space<vmem>>, %arg18: memref<128x128xf32, #tpu.memory_space<vmem>>, %arg19: memref<1x128xf32, #tpu.memory_space<vmem>>, %arg20: memref<128x128xf32, #tpu.memory_space<vmem>>, %arg21: memref<1x128xf32, #tpu.memory_space<vmem>>, %arg22: memref<64x384xf32, #tpu.memory_space<vmem>>) attributes {dimension_semantics = [#tpu.dimension_semantics<parallel>], iteration_bounds = array<i64: 1>, scalar_prefetch = 0 : i64, scratch_operands = 0 : i64, tpu.core_type = #tpu.core_type<tc>, window_params = [{transform_indices = @transform_0, window_bounds = array<i64: 64, 16>}, {transform_indices = @transform_1, window_bounds = array<i64: 64, 16>}, {transform_indices = @transform_2, window_bounds = array<i64: 64, 128>}, {pipeline_mode = #tpu.pipeline_mode<synchronous>, transform_indices = @transform_3, window_bounds = array<i64: 16, 128>}, {pipeline_mode = #tpu.pipeline_mode<synchronous>, transform_indices = @transform_4, window_bounds = array<i64: 1, 128>}, {pipeline_mode = #tpu.pipeline_mode<synchronous>, transform_indices = @transform_5, window_bounds = array<i64: 128, 128>}, {pipeline_mode = #tpu.pipeline_mode<synchronous>, transform_indices = @transform_6, window_bounds = array<i64: 1, 128>}, {pipeline_mode = #tpu.pipeline_mode<synchronous>, transform_indices = @transform_7, window_bounds = array<i64: 128, 128>}, {pipeline_mode = #tpu.pipeline_mode<synchronous>, transform_indices = @transform_8, window_bounds = array<i64: 1, 128>}, {pipeline_mode = #tpu.pipeline_mode<synchronous>, transform_indices = @transform_9, window_bounds = array<i64: 128, 128>}, {pipeline_mode = #tpu.pipeline_mode<synchronous>, transform_indices = @transform_10, window_bounds = array<i64: 128, 128>}, {pipeline_mode = #tpu.pipeline_mode<synchronous>, transform_indices = @transform_11, window_bounds = array<i64: 1, 128>}, {pipeline_mode = #tpu.pipeline_mode<synchronous>, transform_indices = @transform_12, window_bounds = array<i64: 128, 128>}, {pipeline_mode = #tpu.pipeline_mode<synchronous>, transform_indices = @transform_13, window_bounds = array<i64: 1, 128>}, {pipeline_mode = #tpu.pipeline_mode<synchronous>, transform_indices = @transform_14, window_bounds = array<i64: 128, 128>}, {pipeline_mode = #tpu.pipeline_mode<synchronous>, transform_indices = @transform_15, window_bounds = array<i64: 128, 128>}, {pipeline_mode = #tpu.pipeline_mode<synchronous>, transform_indices = @transform_16, window_bounds = array<i64: 1, 128>}, {pipeline_mode = #tpu.pipeline_mode<synchronous>, transform_indices = @transform_17, window_bounds = array<i64: 128, 128>}, {pipeline_mode = #tpu.pipeline_mode<synchronous>, transform_indices = @transform_18, window_bounds = array<i64: 1, 128>}, {pipeline_mode = #tpu.pipeline_mode<synchronous>, transform_indices = @transform_19, window_bounds = array<i64: 128, 128>}, {pipeline_mode = #tpu.pipeline_mode<synchronous>, transform_indices = @transform_20, window_bounds = array<i64: 1, 128>}, {transform_indices = @transform_21, window_bounds = array<i64: 64, 384>}]} {
    %c0 = arith.constant 0 : index
    %c0_0 = arith.constant 0 : index
    %0 = vector.load %arg4[%c0, %c0_0] : memref<16x128xf32, #tpu.memory_space<vmem>>, vector<16x128xf32>
    %c0_1 = arith.constant 0 : index
    %c0_2 = arith.constant 0 : index
    %1 = vector.load %arg5[%c0_1, %c0_2] : memref<1x128xf32, #tpu.memory_space<vmem>>, vector<1x128xf32>
    %c0_3 = arith.constant 0 : index
    %c0_4 = arith.constant 0 : index
    %2 = vector.load %arg6[%c0_3, %c0_4] : memref<128x128xf32, #tpu.memory_space<vmem>>, vector<128x128xf32>
    %c0_5 = arith.constant 0 : index
    %c0_6 = arith.constant 0 : index
    %3 = vector.load %arg7[%c0_5, %c0_6] : memref<1x128xf32, #tpu.memory_space<vmem>>, vector<1x128xf32>
    %c0_7 = arith.constant 0 : index
    %c0_8 = arith.constant 0 : index
    %4 = vector.load %arg8[%c0_7, %c0_8] : memref<128x128xf32, #tpu.memory_space<vmem>>, vector<128x128xf32>
    %c0_9 = arith.constant 0 : index
    %c0_10 = arith.constant 0 : index
    %5 = vector.load %arg9[%c0_9, %c0_10] : memref<1x128xf32, #tpu.memory_space<vmem>>, vector<1x128xf32>
    %c0_11 = arith.constant 0 : index
    %c0_12 = arith.constant 0 : index
    %6 = vector.load %arg10[%c0_11, %c0_12] : memref<128x128xf32, #tpu.memory_space<vmem>>, vector<128x128xf32>
    %c0_13 = arith.constant 0 : index
    %c0_14 = arith.constant 0 : index
    %7 = vector.load %arg11[%c0_13, %c0_14] : memref<128x128xf32, #tpu.memory_space<vmem>>, vector<128x128xf32>
    %c0_15 = arith.constant 0 : index
    %c0_16 = arith.constant 0 : index
    %8 = vector.load %arg12[%c0_15, %c0_16] : memref<1x128xf32, #tpu.memory_space<vmem>>, vector<1x128xf32>
    %c0_17 = arith.constant 0 : index
    %c0_18 = arith.constant 0 : index
    %9 = vector.load %arg13[%c0_17, %c0_18] : memref<128x128xf32, #tpu.memory_space<vmem>>, vector<128x128xf32>
    %c0_19 = arith.constant 0 : index
    %c0_20 = arith.constant 0 : index
    %10 = vector.load %arg14[%c0_19, %c0_20] : memref<1x128xf32, #tpu.memory_space<vmem>>, vector<1x128xf32>
    %c0_21 = arith.constant 0 : index
    %c0_22 = arith.constant 0 : index
    %11 = vector.load %arg15[%c0_21, %c0_22] : memref<128x128xf32, #tpu.memory_space<vmem>>, vector<128x128xf32>
    %c0_23 = arith.constant 0 : index
    %c0_24 = arith.constant 0 : index
    %12 = vector.load %arg16[%c0_23, %c0_24] : memref<128x128xf32, #tpu.memory_space<vmem>>, vector<128x128xf32>
    %c0_25 = arith.constant 0 : index
    %c0_26 = arith.constant 0 : index
    %13 = vector.load %arg17[%c0_25, %c0_26] : memref<1x128xf32, #tpu.memory_space<vmem>>, vector<1x128xf32>
    %c0_27 = arith.constant 0 : index
    %c0_28 = arith.constant 0 : index
    %14 = vector.load %arg18[%c0_27, %c0_28] : memref<128x128xf32, #tpu.memory_space<vmem>>, vector<128x128xf32>
    %c0_29 = arith.constant 0 : index
    %c0_30 = arith.constant 0 : index
    %15 = vector.load %arg19[%c0_29, %c0_30] : memref<1x128xf32, #tpu.memory_space<vmem>>, vector<1x128xf32>
    %c0_31 = arith.constant 0 : index
    %c0_32 = arith.constant 0 : index
    %16 = vector.load %arg20[%c0_31, %c0_32] : memref<128x128xf32, #tpu.memory_space<vmem>>, vector<128x128xf32>
    %c0_33 = arith.constant 0 : index
    %c0_34 = arith.constant 0 : index
    %17 = vector.load %arg21[%c0_33, %c0_34] : memref<1x128xf32, #tpu.memory_space<vmem>>, vector<1x128xf32>
    %c0_35 = arith.constant 0 : index
    %c0_36 = arith.constant 0 : index
    %18 = vector.load %arg1[%c0_35, %c0_36] : memref<64x16xf32, #tpu.memory_space<vmem>>, vector<64x16xf32>
    %c0_37 = arith.constant 0 : index
    %c0_38 = arith.constant 0 : index
    %19 = vector.load %arg2[%c0_37, %c0_38] : memref<64x16xf32, #tpu.memory_space<vmem>>, vector<64x16xf32>
    %20 = tpu.concatenate %18, %19 in 0 : vector<64x16xf32>, vector<64x16xf32> -> vector<128x16xf32>
    %cst = arith.constant dense<0.000000e+00> : vector<128x128xf32>
    %21 = tpu.matmul %20, %0, %cst {dimension_numbers = #tpu.dot_dimension_numbers<[1], [0], [0], [1], [0, 0, 1, 1], [], []>} : vector<128x16xf32>, vector<16x128xf32>, vector<128x128xf32> -> vector<128x128xf32>
    %22 = vector.broadcast %1 : vector<1x128xf32> to vector<128x128xf32>
    %23 = arith.addf %21, %22 : vector<128x128xf32>
    %cst_39 = arith.constant 0.000000e+00 : f32
    %24 = vector.broadcast %cst_39 : f32 to vector<128x128xf32>
    %25 = arith.cmpf ogt, %23, %24 : vector<128x128xf32>
    %cst_40 = arith.constant 0.00999999977 : f32
    %26 = vector.broadcast %cst_40 : f32 to vector<128x128xf32>
    %27 = arith.mulf %26, %23 : vector<128x128xf32>
    %28 = arith.select %25, %23, %27 : vector<128x128xi1>, vector<128x128xf32>
    %cst_41 = arith.constant dense<0.000000e+00> : vector<128x128xf32>
    %29 = tpu.matmul %28, %2, %cst_41 {dimension_numbers = #tpu.dot_dimension_numbers<[1], [0], [0], [1], [0, 0, 1, 1], [], []>} : vector<128x128xf32>, vector<128x128xf32>, vector<128x128xf32> -> vector<128x128xf32>
    %30 = vector.broadcast %3 : vector<1x128xf32> to vector<128x128xf32>
    %31 = arith.addf %29, %30 : vector<128x128xf32>
    %cst_42 = arith.constant 0.000000e+00 : f32
    %32 = vector.broadcast %cst_42 : f32 to vector<128x128xf32>
    %33 = arith.cmpf ogt, %31, %32 : vector<128x128xf32>
    %cst_43 = arith.constant 0.00999999977 : f32
    %34 = vector.broadcast %cst_43 : f32 to vector<128x128xf32>
    %35 = arith.mulf %34, %31 : vector<128x128xf32>
    %36 = arith.select %33, %31, %35 : vector<128x128xi1>, vector<128x128xf32>
    %cst_44 = arith.constant dense<0.000000e+00> : vector<128x128xf32>
    %37 = tpu.matmul %36, %4, %cst_44 {dimension_numbers = #tpu.dot_dimension_numbers<[1], [0], [0], [1], [0, 0, 1, 1], [], []>} : vector<128x128xf32>, vector<128x128xf32>, vector<128x128xf32> -> vector<128x128xf32>
    %38 = vector.broadcast %5 : vector<1x128xf32> to vector<128x128xf32>
    %39 = arith.addf %37, %38 : vector<128x128xf32>
    %40 = vector.extract_strided_slice %39 {offsets = [0, 0], sizes = [64, 128], strides = [1, 1]} : vector<128x128xf32> to vector<64x128xf32>
    %41 = vector.extract_strided_slice %39 {offsets = [64, 0], sizes = [64, 128], strides = [1, 1]} : vector<128x128xf32> to vector<64x128xf32>
    %cst_45 = arith.constant dense<0.000000e+00> : vector<64x128xf32>
    %42 = tpu.matmul %40, %6, %cst_45 {dimension_numbers = #tpu.dot_dimension_numbers<[1], [0], [0], [1], [0, 0, 1, 1], [], []>} : vector<64x128xf32>, vector<128x128xf32>, vector<64x128xf32> -> vector<64x128xf32>
    %c0_46 = arith.constant 0 : index
    %c0_47 = arith.constant 0 : index
    %43 = vector.load %arg3[%c0_46, %c0_47] : memref<64x128xf32, #tpu.memory_space<vmem>>, vector<64x128xf32>
    %44 = arith.addf %42, %43 : vector<64x128xf32>
    %cst_48 = arith.constant 0.000000e+00 : f32
    %45 = vector.broadcast %cst_48 : f32 to vector<64x128xf32>
    %46 = arith.cmpf ogt, %44, %45 : vector<64x128xf32>
    %cst_49 = arith.constant 0.00999999977 : f32
    %47 = vector.broadcast %cst_49 : f32 to vector<64x128xf32>
    %48 = arith.mulf %47, %44 : vector<64x128xf32>
    %49 = arith.select %46, %44, %48 : vector<64x128xi1>, vector<64x128xf32>
    %cst_50 = arith.constant dense<0.000000e+00> : vector<64x128xf32>
    %50 = tpu.matmul %49, %7, %cst_50 {dimension_numbers = #tpu.dot_dimension_numbers<[1], [0], [0], [1], [0, 0, 1, 1], [], []>} : vector<64x128xf32>, vector<128x128xf32>, vector<64x128xf32> -> vector<64x128xf32>
    %51 = vector.broadcast %8 : vector<1x128xf32> to vector<64x128xf32>
    %52 = arith.addf %50, %51 : vector<64x128xf32>
    %cst_51 = arith.constant 0.000000e+00 : f32
    %53 = vector.broadcast %cst_51 : f32 to vector<64x128xf32>
    %54 = arith.cmpf ogt, %52, %53 : vector<64x128xf32>
    %cst_52 = arith.constant 0.00999999977 : f32
    %55 = vector.broadcast %cst_52 : f32 to vector<64x128xf32>
    %56 = arith.mulf %55, %52 : vector<64x128xf32>
    %57 = arith.select %54, %52, %56 : vector<64x128xi1>, vector<64x128xf32>
    %cst_53 = arith.constant dense<0.000000e+00> : vector<64x128xf32>
    %58 = tpu.matmul %57, %9, %cst_53 {dimension_numbers = #tpu.dot_dimension_numbers<[1], [0], [0], [1], [0, 0, 1, 1], [], []>} : vector<64x128xf32>, vector<128x128xf32>, vector<64x128xf32> -> vector<64x128xf32>
    %59 = vector.broadcast %10 : vector<1x128xf32> to vector<64x128xf32>
    %60 = arith.addf %58, %59 : vector<64x128xf32>
    %cst_54 = arith.constant dense<0.000000e+00> : vector<64x128xf32>
    %61 = tpu.matmul %40, %11, %cst_54 {dimension_numbers = #tpu.dot_dimension_numbers<[1], [0], [0], [1], [0, 0, 1, 1], [], []>} : vector<64x128xf32>, vector<128x128xf32>, vector<64x128xf32> -> vector<64x128xf32>
    %cst_55 = arith.constant dense<0.000000e+00> : vector<64x128xf32>
    %62 = tpu.matmul %41, %12, %cst_55 {dimension_numbers = #tpu.dot_dimension_numbers<[1], [0], [0], [1], [0, 0, 1, 1], [], []>} : vector<64x128xf32>, vector<128x128xf32>, vector<64x128xf32> -> vector<64x128xf32>
    %63 = arith.addf %61, %62 : vector<64x128xf32>
    %64 = vector.broadcast %13 : vector<1x128xf32> to vector<64x128xf32>
    %65 = arith.addf %63, %64 : vector<64x128xf32>
    %cst_56 = arith.constant 0.000000e+00 : f32
    %66 = vector.broadcast %cst_56 : f32 to vector<64x128xf32>
    %67 = arith.cmpf ogt, %65, %66 : vector<64x128xf32>
    %cst_57 = arith.constant 0.00999999977 : f32
    %68 = vector.broadcast %cst_57 : f32 to vector<64x128xf32>
    %69 = arith.mulf %68, %65 : vector<64x128xf32>
    %70 = arith.select %67, %65, %69 : vector<64x128xi1>, vector<64x128xf32>
    %cst_58 = arith.constant dense<0.000000e+00> : vector<64x128xf32>
    %71 = tpu.matmul %70, %14, %cst_58 {dimension_numbers = #tpu.dot_dimension_numbers<[1], [0], [0], [1], [0, 0, 1, 1], [], []>} : vector<64x128xf32>, vector<128x128xf32>, vector<64x128xf32> -> vector<64x128xf32>
    %72 = vector.broadcast %15 : vector<1x128xf32> to vector<64x128xf32>
    %73 = arith.addf %71, %72 : vector<64x128xf32>
    %cst_59 = arith.constant 0.000000e+00 : f32
    %74 = vector.broadcast %cst_59 : f32 to vector<64x128xf32>
    %75 = arith.cmpf ogt, %73, %74 : vector<64x128xf32>
    %cst_60 = arith.constant 0.00999999977 : f32
    %76 = vector.broadcast %cst_60 : f32 to vector<64x128xf32>
    %77 = arith.mulf %76, %73 : vector<64x128xf32>
    %78 = arith.select %75, %73, %77 : vector<64x128xi1>, vector<64x128xf32>
    %cst_61 = arith.constant dense<0.000000e+00> : vector<64x128xf32>
    %79 = tpu.matmul %78, %16, %cst_61 {dimension_numbers = #tpu.dot_dimension_numbers<[1], [0], [0], [1], [0, 0, 1, 1], [], []>} : vector<64x128xf32>, vector<128x128xf32>, vector<64x128xf32> -> vector<64x128xf32>
    %80 = vector.broadcast %17 : vector<1x128xf32> to vector<64x128xf32>
    %81 = arith.addf %79, %80 : vector<64x128xf32>
    %c0_62 = arith.constant 0 : index
    %c0_63 = arith.constant 0 : index
    %82 = vector.load %arg22[%c0_62, %c0_63] : memref<64x384xf32, #tpu.memory_space<vmem>>, vector<64x128xf32>
    tpu.vector_store %arg22[%c0_62, %c0_63], %41 {strides = array<i32>} : memref<64x384xf32, #tpu.memory_space<vmem>>, vector<64x128xf32>,
    %c0_64 = arith.constant 0 : index
    %c128 = arith.constant 128 : index
    %83 = vector.load %arg22[%c0_64, %c128] : memref<64x384xf32, #tpu.memory_space<vmem>>, vector<64x128xf32>
    tpu.vector_store %arg22[%c0_64, %c128], %60 {strides = array<i32>} : memref<64x384xf32, #tpu.memory_space<vmem>>, vector<64x128xf32>,
    %c0_65 = arith.constant 0 : index
    %c256 = arith.constant 256 : index
    %84 = vector.load %arg22[%c0_65, %c256] : memref<64x384xf32, #tpu.memory_space<vmem>>, vector<64x128xf32>
    tpu.vector_store %arg22[%c0_65, %c256], %81 {strides = array<i32>} : memref<64x384xf32, #tpu.memory_space<vmem>>, vector<64x128xf32>,
    return
  }
  func.func @transform_0(%arg0: i32) -> (i32, i32) {
    %c0_i32 = arith.constant 0 : i32
    %c0_i32_0 = arith.constant 0 : i32
    return %arg0, %c0_i32 : i32, i32
  }
  func.func @transform_1(%arg0: i32) -> (i32, i32) {
    %c0_i32 = arith.constant 0 : i32
    %c0_i32_0 = arith.constant 0 : i32
    return %arg0, %c0_i32 : i32, i32
  }
  func.func @transform_2(%arg0: i32) -> (i32, i32) {
    %c0_i32 = arith.constant 0 : i32
    %c0_i32_0 = arith.constant 0 : i32
    return %arg0, %c0_i32 : i32, i32
  }
  func.func @transform_3(%arg0: i32) -> (i32, i32) {
    %c0_i32 = arith.constant 0 : i32
    %c0_i32_0 = arith.constant 0 : i32
    %c0_i32_1 = arith.constant 0 : i32
    return %c0_i32, %c0_i32_0 : i32, i32
  }
  func.func @transform_4(%arg0: i32) -> (i32, i32) {
    %c0_i32 = arith.constant 0 : i32
    %c0_i32_0 = arith.constant 0 : i32
    %c0_i32_1 = arith.constant 0 : i32
    return %c0_i32, %c0_i32_0 : i32, i32
  }
  func.func @transform_5(%arg0: i32) -> (i32, i32) {
    %c0_i32 = arith.constant 0 : i32
    %c0_i32_0 = arith.constant 0 : i32
    %c0_i32_1 = arith.constant 0 : i32
    return %c0_i32, %c0_i32_0 : i32, i32
  }
  func.func @transform_6(%arg0: i32) -> (i32, i32) {
    %c0_i32 = arith.constant 0 : i32
    %c0_i32_0 = arith.constant 0 : i32
    %c0_i32_1 = arith.constant 0 : i32
    return %c0_i32, %c0_i32_0 : i32, i32
  }
  func.func @transform_7(%arg0: i32) -> (i32, i32) {
    %c0_i32 = arith.constant 0 : i32
    %c0_i32_0 = arith.constant 0 : i32
    %c0_i32_1 = arith.constant 0 : i32
    return %c0_i32, %c0_i32_0 : i32, i32
  }
  func.func @transform_8(%arg0: i32) -> (i32, i32) {
    %c0_i32 = arith.constant 0 : i32
    %c0_i32_0 = arith.constant 0 : i32
    %c0_i32_1 = arith.constant 0 : i32
    return %c0_i32, %c0_i32_0 : i32, i32
  }
  func.func @transform_9(%arg0: i32) -> (i32, i32) {
    %c0_i32 = arith.constant 0 : i32
    %c0_i32_0 = arith.constant 0 : i32
    %c0_i32_1 = arith.constant 0 : i32
    return %c0_i32, %c0_i32_0 : i32, i32
  }
  func.func @transform_10(%arg0: i32) -> (i32, i32) {
    %c0_i32 = arith.constant 0 : i32
    %c0_i32_0 = arith.constant 0 : i32
    %c0_i32_1 = arith.constant 0 : i32
    return %c0_i32, %c0_i32_0 : i32, i32
  }
  func.func @transform_11(%arg0: i32) -> (i32, i32) {
    %c0_i32 = arith.constant 0 : i32
    %c0_i32_0 = arith.constant 0 : i32
    %c0_i32_1 = arith.constant 0 : i32
    return %c0_i32, %c0_i32_0 : i32, i32
  }
  func.func @transform_12(%arg0: i32) -> (i32, i32) {
    %c0_i32 = arith.constant 0 : i32
    %c0_i32_0 = arith.constant 0 : i32
    %c0_i32_1 = arith.constant 0 : i32
    return %c0_i32, %c0_i32_0 : i32, i32
  }
  func.func @transform_13(%arg0: i32) -> (i32, i32) {
    %c0_i32 = arith.constant 0 : i32
    %c0_i32_0 = arith.constant 0 : i32
    %c0_i32_1 = arith.constant 0 : i32
    return %c0_i32, %c0_i32_0 : i32, i32
  }
  func.func @transform_14(%arg0: i32) -> (i32, i32) {
    %c0_i32 = arith.constant 0 : i32
    %c0_i32_0 = arith.constant 0 : i32
    %c0_i32_1 = arith.constant 0 : i32
    return %c0_i32, %c0_i32_0 : i32, i32
  }
  func.func @transform_15(%arg0: i32) -> (i32, i32) {
    %c0_i32 = arith.constant 0 : i32
    %c0_i32_0 = arith.constant 0 : i32
    %c0_i32_1 = arith.constant 0 : i32
    return %c0_i32, %c0_i32_0 : i32, i32
  }
  func.func @transform_16(%arg0: i32) -> (i32, i32) {
    %c0_i32 = arith.constant 0 : i32
    %c0_i32_0 = arith.constant 0 : i32
    %c0_i32_1 = arith.constant 0 : i32
    return %c0_i32, %c0_i32_0 : i32, i32
  }
  func.func @transform_17(%arg0: i32) -> (i32, i32) {
    %c0_i32 = arith.constant 0 : i32
    %c0_i32_0 = arith.constant 0 : i32
    %c0_i32_1 = arith.constant 0 : i32
    return %c0_i32, %c0_i32_0 : i32, i32
  }
  func.func @transform_18(%arg0: i32) -> (i32, i32) {
    %c0_i32 = arith.constant 0 : i32
    %c0_i32_0 = arith.constant 0 : i32
    %c0_i32_1 = arith.constant 0 : i32
    return %c0_i32, %c0_i32_0 : i32, i32
  }
  func.func @transform_19(%arg0: i32) -> (i32, i32) {
    %c0_i32 = arith.constant 0 : i32
    %c0_i32_0 = arith.constant 0 : i32
    %c0_i32_1 = arith.constant 0 : i32
    return %c0_i32, %c0_i32_0 : i32, i32
  }
  func.func @transform_20(%arg0: i32) -> (i32, i32) {
    %c0_i32 = arith.constant 0 : i32
    %c0_i32_0 = arith.constant 0 : i32
    %c0_i32_1 = arith.constant 0 : i32
    return %c0_i32, %c0_i32_0 : i32, i32
  }
  func.func @transform_21(%arg0: i32) -> (i32, i32) {
    %c0_i32 = arith.constant 0 : i32
    %c0_i32_0 = arith.constant 0 : i32
    return %arg0, %c0_i32 : i32, i32
  }
}

</mosaic_0001>

<llo_original>
// kernel: icm_forward.1
$region0: #{icm_forward.1}
  #allocation0 [shape = 'u32[]', space=smem, size = 0x4, offset = 0x4, fixed_abs, tag = 'smem constant byte address 0x4 - core index']
  #allocation1 [shape = 'u32[144,128]{1,0:T(1,128)}', space=vmem, size = 0x12000, scoped, tag = 'internal scratch']
  %s0 = inlined_call_operand.vmem [shape: f32[64,16], index: 0, kind: input, shape index: {}]
  %s1 = inlined_call_operand.vmem [shape: f32[64,16], index: 1, kind: input, shape index: {}]
  %s2 = inlined_call_operand.vmem [shape: f32[64,128], index: 2, kind: input, shape index: {}]
  %s3 = inlined_call_operand.vmem [shape: f32[16,128], index: 3, kind: input, shape index: {}]
  %s4 = inlined_call_operand.vmem [shape: f32[1,128], index: 4, kind: input, shape index: {}]
  %s5 = inlined_call_operand.vmem [shape: f32[128,128], index: 5, kind: input, shape index: {}]
  %s6 = inlined_call_operand.vmem [shape: f32[1,128], index: 6, kind: input, shape index: {}]
  %s7 = inlined_call_operand.vmem [shape: f32[128,128], index: 7, kind: input, shape index: {}]
  %s8 = inlined_call_operand.vmem [shape: f32[1,128], index: 8, kind: input, shape index: {}]
  %s9 = inlined_call_operand.vmem [shape: f32[128,128], index: 9, kind: input, shape index: {}]
  %s10 = inlined_call_operand.vmem [shape: f32[128,128], index: 10, kind: input, shape index: {}]
  %s11 = inlined_call_operand.vmem [shape: f32[1,128], index: 11, kind: input, shape index: {}]
  %s12 = inlined_call_operand.vmem [shape: f32[128,128], index: 12, kind: input, shape index: {}]
  %s13 = inlined_call_operand.vmem [shape: f32[1,128], index: 13, kind: input, shape index: {}]
  %s14 = inlined_call_operand.hbm [shape: f32[128,128], index: 14, kind: input, shape index: {}]
  %s15 = inlined_call_operand.hbm [shape: f32[128,128], index: 15, kind: input, shape index: {}]
  %s16 = inlined_call_operand.vmem [shape: f32[1,128], index: 16, kind: input, shape index: {}]
  %s17 = inlined_call_operand.hbm [shape: f32[128,128], index: 17, kind: input, shape index: {}]
  %s18 = inlined_call_operand.vmem [shape: f32[1,128], index: 18, kind: input, shape index: {}]
  %s19 = inlined_call_operand.hbm [shape: f32[128,128], index: 19, kind: input, shape index: {}]
  %s20 = inlined_call_operand.vmem [shape: f32[1,128], index: 20, kind: input, shape index: {}]
  %s21 = inlined_call_operand.vmem [shape: f32[64,384], index: 21, kind: output, shape index: {}]
  %s22 = sld [smem:[#allocation0]]
  $region110: #{icm_forward.1} parent=0
    _
  %s24 = ssub.s32 1, %s22
  %s25 = scalar_select 0, %s24, %s22
  $region1: #{icm_forward.1} parent=0
    #allocation2 [shape = 'u8[65536]{0}', space=vmem, size = 0x10000, scoped, tag = 'input window, operand 14, single buffered']
    #allocation3 [shape = 's32[1]{0}', space=sflag, size = 0x4, scoped, tag = 'scoped memory for icm_forward.1']
    #allocation4 [shape = 'u8[65536]{0}', space=vmem, size = 0x10000, scoped, tag = 'input window, operand 15, single buffered']
    #allocation5 [shape = 's32[1]{0}', space=sflag, size = 0x4, scoped, tag = 'scoped memory for icm_forward.1']
    #allocation6 [shape = 'u8[65536]{0}', space=vmem, size = 0x10000, scoped, tag = 'input window, operand 17, single buffered']
    #allocation7 [shape = 'u8[65536]{0}', space=vmem, size = 0x10000, scoped, tag = 'input window, operand 19, single buffered']
    #allocation8 [shape = 's32[1]{0}', space=sflag, size = 0x4, scoped, tag = 'scoped memory for icm_forward.1']
    %26 = vsyncpa [#allocation3], 0
    %27 = vsyncpa [#allocation5], 0
    %28 = vsyncpa [#allocation8], 0
    // Predicated region
    $region2: #{icm_forward.1} parent=1 // pred_check
      _
    $region3: #{icm_forward.1} parent=1 // pred_check_branch
      %30 = sbr.rel (0) target = $region5
    $region4: #{icm_forward.1} parent=1 // pred_region
      _
    $region5: #{icm_forward.1} parent=1 // pred_fallthru
      _
    // Predicated region
    $region6: #{icm_forward.1} parent=1 // pred_check
      _
    $region7: #{icm_forward.1} parent=1 // pred_check_branch
      %32 = sbr.rel (0) target = $region9
    $region8: #{icm_forward.1} parent=1 // pred_region
      _
    $region9: #{icm_forward.1} parent=1 // pred_fallthru
      _
    // Predicated region
    $region10: #{icm_forward.1} parent=1 // pred_check
      _
    $region11: #{icm_forward.1} parent=1 // pred_check_branch
      %34 = sbr.rel (0) target = $region13
    $region12: #{icm_forward.1} parent=1 // pred_region
      _
    $region13: #{icm_forward.1} parent=1 // pred_fallthru
      _
    // Predicated region
    $region14: #{icm_forward.1} parent=1 // pred_check
      _
    $region15: #{icm_forward.1} parent=1 // pred_check_branch
      %36 = sbr.rel (0) target = $region17
    $region16: #{icm_forward.1} parent=1 // pred_region
      _
    $region17: #{icm_forward.1} parent=1 // pred_fallthru
      _
    // Predicated region
    $region18: #{icm_forward.1} parent=1 // pred_check
      _
    $region19: #{icm_forward.1} parent=1 // pred_check_branch
      %38 = sbr.rel (0) target = $region21
    $region20: #{icm_forward.1} parent=1 // pred_region
      _
    $region21: #{icm_forward.1} parent=1 // pred_fallthru
      _
    // Predicated region
    $region22: #{icm_forward.1} parent=1 // pred_check
      _
    $region23: #{icm_forward.1} parent=1 // pred_check_branch
      %40 = sbr.rel (0) target = $region25
    $region24: #{icm_forward.1} parent=1 // pred_region
      _
    $region25: #{icm_forward.1} parent=1 // pred_fallthru
      _
    // Predicated region
    $region26: #{icm_forward.1} parent=1 // pred_check
      _
    $region27: #{icm_forward.1} parent=1 // pred_check_branch
      %42 = sbr.rel (0) target = $region29
    $region28: #{icm_forward.1} parent=1 // pred_region
      _
    $region29: #{icm_forward.1} parent=1 // pred_fallthru
      _
    // Predicated region
    $region30: #{icm_forward.1} parent=1 // pred_check
      _
    $region31: #{icm_forward.1} parent=1 // pred_check_branch
      %44 = sbr.rel (0) target = $region33
    $region32: #{icm_forward.1} parent=1 // pred_region
      _
    $region33: #{icm_forward.1} parent=1 // pred_fallthru
      _
    // Predicated region
    $region34: #{icm_forward.1} parent=1 // pred_check
      _
    $region35: #{icm_forward.1} parent=1 // pred_check_branch
      %46 = sbr.rel (0) target = $region37
    $region36: #{icm_forward.1} parent=1 // pred_region
      _
    $region37: #{icm_forward.1} parent=1 // pred_fallthru
      _
    // Predicated region
    $region38: #{icm_forward.1} parent=1 // pred_check
      _
    $region39: #{icm_forward.1} parent=1 // pred_check_branch
      %48 = sbr.rel (0) target = $region41
    $region40: #{icm_forward.1} parent=1 // pred_region
      _
    $region41: #{icm_forward.1} parent=1 // pred_fallthru
      _
    // Predicated region
    $region42: #{icm_forward.1} parent=1 // pred_check
      _
    $region43: #{icm_forward.1} parent=1 // pred_check_branch
      %50 = sbr.rel (0) target = $region45
    $region44: #{icm_forward.1} parent=1 // pred_region
      _
    $region45: #{icm_forward.1} parent=1 // pred_fallthru
      _
    // Predicated region
    $region46: #{icm_forward.1} parent=1 // pred_check
      _
    $region47: #{icm_forward.1} parent=1 // pred_check_branch
      %52 = sbr.rel (0) target = $region49
    $region48: #{icm_forward.1} parent=1 // pred_region
      _
    $region49: #{icm_forward.1} parent=1 // pred_fallthru
      _
    // Predicated region
    $region50: #{icm_forward.1} parent=1 // pred_check
      _
    $region51: #{icm_forward.1} parent=1 // pred_check_branch
      %54 = sbr.rel (0) target = $region53
    $region52: #{icm_forward.1} parent=1 // pred_region
      _
    $region53: #{icm_forward.1} parent=1 // pred_fallthru
      _
    // Predicated region
    $region54: #{icm_forward.1} parent=1 // pred_check
      _
    $region55: #{icm_forward.1} parent=1 // pred_check_branch
      %56 = sbr.rel (0) target = $region57
    $region56: #{icm_forward.1} parent=1 // pred_region
      _
    $region57: #{icm_forward.1} parent=1 // pred_fallthru
      _
    // Predicated region
    $region58: #{icm_forward.1} parent=1 // pred_check
      _
    $region59: #{icm_forward.1} parent=1 // pred_check_branch
      %58 = sbr.rel (0) target = $region61
    $region60: #{icm_forward.1} parent=1 // pred_region
      %s60 = ssub.s32 2048, 2048
      %61 = vsyncadd [#allocation3], %s60
      %s62 = sshll.u32 [#allocation2], 4
      %s63 = int_to_ptr.vmem [resolvable:$true] %s62
      %68 = dma.hbm_to_vmem [thread:$0]  %s14, 2048, %s63, [#allocation3], 128, 128, 8
    $region61: #{icm_forward.1} parent=1 // pred_fallthru
      _
    // Predicated region
    $region62: #{icm_forward.1} parent=1 // pred_check
      _
    $region63: #{icm_forward.1} parent=1 // pred_check_branch
      %70 = sbr.rel (0) target = $region65
    $region64: #{icm_forward.1} parent=1 // pred_region
      %s72 = ssub.s32 2048, 2048
      %73 = vsyncadd [#allocation5], %s72
      %s74 = sshll.u32 [#allocation4], 4
      %s75 = int_to_ptr.vmem [resolvable:$true] %s74
      %80 = dma.hbm_to_vmem [thread:$0]  %s15, 2048, %s75, [#allocation5], 128, 128, 8
    $region65: #{icm_forward.1} parent=1 // pred_fallthru
      _
    // Predicated region
    $region66: #{icm_forward.1} parent=1 // pred_check
      _
    $region67: #{icm_forward.1} parent=1 // pred_check_branch
      %82 = sbr.rel (0) target = $region69
    $region68: #{icm_forward.1} parent=1 // pred_region
      _
    $region69: #{icm_forward.1} parent=1 // pred_fallthru
      _
    // Predicated region
    $region70: #{icm_forward.1} parent=1 // pred_check
      _
    $region71: #{icm_forward.1} parent=1 // pred_check_branch
      %84 = sbr.rel (0) target = $region73
    $region72: #{icm_forward.1} parent=1 // pred_region
      %s86 = ssub.s32 2048, 2048
      %87 = vsyncadd [#allocation5], %s86
      %s88 = sshll.u32 [#allocation6], 4
      %s89 = int_to_ptr.vmem [resolvable:$true] %s88
      %94 = dma.hbm_to_vmem [thread:$0]  %s17, 2048, %s89, [#allocation5], 128, 128, 8
    $region73: #{icm_forward.1} parent=1 // pred_fallthru
      _
    // Predicated region
    $region74: #{icm_forward.1} parent=1 // pred_check
      _
    $region75: #{icm_forward.1} parent=1 // pred_check_branch
      %96 = sbr.rel (0) target = $region77
    $region76: #{icm_forward.1} parent=1 // pred_region
      _
    $region77: #{icm_forward.1} parent=1 // pred_fallthru
      _
    // Predicated region
    $region78: #{icm_forward.1} parent=1 // pred_check
      _
    $region79: #{icm_forward.1} parent=1 // pred_check_branch
      %98 = sbr.rel (0) target = $region81
    $region80: #{icm_forward.1} parent=1 // pred_region
      %s100 = ssub.s32 2048, 2048
      %101 = vsyncadd [#allocation8], %s100
      %s102 = sshll.u32 [#allocation7], 4
      %s103 = int_to_ptr.vmem [resolvable:$true] %s102
      %108 = dma.hbm_to_vmem [thread:$0]  %s19, 2048, %s103, [#allocation8], 128, 128, 8
    $region81: #{icm_forward.1} parent=1 // pred_fallthru
      _
    // Predicated region
    $region82: #{icm_forward.1} parent=1 // pred_check
      _
    $region83: #{icm_forward.1} parent=1 // pred_check_branch
      %110 = sbr.rel (0) target = $region85
    $region84: #{icm_forward.1} parent=1 // pred_region
      _
    $region85: #{icm_forward.1} parent=1 // pred_fallthru
      _
    // Predicated region
    $region86: #{icm_forward.1} parent=1 // pred_check
      _
    $region87: #{icm_forward.1} parent=1 // pred_check_branch
      %112 = sbr.rel (0) target = $region89
    $region88: #{icm_forward.1} parent=1 // pred_region
      %113 = dma.done [#allocation3], 2048
    $region89: #{icm_forward.1} parent=1 // pred_fallthru
      _
    // Predicated region
    $region90: #{icm_forward.1} parent=1 // pred_check
      _
    $region91: #{icm_forward.1} parent=1 // pred_check_branch
      %115 = sbr.rel (0) target = $region93
    $region92: #{icm_forward.1} parent=1 // pred_region
      %116 = dma.done [#allocation5], 2048
    $region93: #{icm_forward.1} parent=1 // pred_fallthru
      _
    // Predicated region
    $region94: #{icm_forward.1} parent=1 // pred_check
      _
    $region95: #{icm_forward.1} parent=1 // pred_check_branch
      %118 = sbr.rel (0) target = $region97
    $region96: #{icm_forward.1} parent=1 // pred_region
      %119 = dma.done [#allocation5], 2048
    $region97: #{icm_forward.1} parent=1 // pred_fallthru
      _
    // Predicated region
    $region98: #{icm_forward.1} parent=1 // pred_check
      _
    $region99: #{icm_forward.1} parent=1 // pred_check_branch
      %121 = sbr.rel (0) target = $region101
    $region100: #{icm_forward.1} parent=1 // pred_region
      %122 = dma.done [#allocation8], 2048
    $region101: #{icm_forward.1} parent=1 // pred_fallthru
      _
    %v123 = vld [vmem:[%s3] sm:$0xff]
    %v124 = vld [vmem:[%s3 + $0x8] sm:$0xff]
    %v125 = vld [vmem:[%s4] sm:$0x1]
    %v126 = vld [vmem:[%s5] sm:$0xff]
    %v127 = vld [vmem:[%s5 + $0x8] sm:$0xff]
    %v128 = vld [vmem:[%s5 + $0x10] sm:$0xff]
    %v129 = vld [vmem:[%s5 + $0x18] sm:$0xff]
    %v130 = vld [vmem:[%s5 + $0x20] sm:$0xff]
    %v131 = vld [vmem:[%s5 + $0x28] sm:$0xff]
    %v132 = vld [vmem:[%s5 + $0x30] sm:$0xff]
    %v133 = vld [vmem:[%s5 + $0x38] sm:$0xff]
    %v134 = vld [vmem:[%s5 + $0x40] sm:$0xff]
    %v135 = vld [vmem:[%s5 + $0x48] sm:$0xff]
    %v136 = vld [vmem:[%s5 + $0x50] sm:$0xff]
    %v137 = vld [vmem:[%s5 + $0x58] sm:$0xff]
    %v138 = vld [vmem:[%s5 + $0x60] sm:$0xff]
    %v139 = vld [vmem:[%s5 + $0x68] sm:$0xff]
    %v140 = vld [vmem:[%s5 + $0x70] sm:$0xff]
    %v141 = vld [vmem:[%s5 + $0x78] sm:$0xff]
    %v142 = vld [vmem:[%s6] sm:$0x1]
    %v143 = vld [vmem:[%s7] sm:$0xff]
    %v144 = vld [vmem:[%s7 + $0x8] sm:$0xff]
    %v145 = vld [vmem:[%s7 + $0x10] sm:$0xff]
    %v146 = vld [vmem:[%s7 + $0x18] sm:$0xff]
    %v147 = vld [vmem:[%s7 + $0x20] sm:$0xff]
    %v148 = vld [vmem:[%s7 + $0x28] sm:$0xff]
    %v149 = vld [vmem:[%s7 + $0x30] sm:$0xff]
    %v150 = vld [vmem:[%s7 + $0x38] sm:$0xff]
    %v151 = vld [vmem:[%s7 + $0x40] sm:$0xff]
    %v152 = vld [vmem:[%s7 + $0x48] sm:$0xff]
    %v153 = vld [vmem:[%s7 + $0x50] sm:$0xff]
    %v154 = vld [vmem:[%s7 + $0x58] sm:$0xff]
    %v155 = vld [vmem:[%s7 + $0x60] sm:$0xff]
    %v156 = vld [vmem:[%s7 + $0x68] sm:$0xff]
    %v157 = vld [vmem:[%s7 + $0x70] sm:$0xff]
    %v158 = vld [vmem:[%s7 + $0x78] sm:$0xff]
    %v159 = vld [vmem:[%s8] sm:$0x1]
    %v160 = vld [vmem:[%s9] sm:$0xff]
    %v161 = vld [vmem:[%s9 + $0x8] sm:$0xff]
    %v162 = vld [vmem:[%s9 + $0x10] sm:$0xff]
    %v163 = vld [vmem:[%s9 + $0x18] sm:$0xff]
    %v164 = vld [vmem:[%s9 + $0x20] sm:$0xff]
    %v165 = vld [vmem:[%s9 + $0x28] sm:$0xff]
    %v166 = vld [vmem:[%s9 + $0x30] sm:$0xff]
    %v167 = vld [vmem:[%s9 + $0x38] sm:$0xff]
    %v168 = vld [vmem:[%s9 + $0x40] sm:$0xff]
    %v169 = vld [vmem:[%s9 + $0x48] sm:$0xff]
    %v170 = vld [vmem:[%s9 + $0x50] sm:$0xff]
    %v171 = vld [vmem:[%s9 + $0x58] sm:$0xff]
    %v172 = vld [vmem:[%s9 + $0x60] sm:$0xff]
    %v173 = vld [vmem:[%s9 + $0x68] sm:$0xff]
    %v174 = vld [vmem:[%s9 + $0x70] sm:$0xff]
    %v175 = vld [vmem:[%s9 + $0x78] sm:$0xff]
    %v176 = vld [vmem:[%s10] sm:$0xff]
    %v177 = vld [vmem:[%s10 + $0x8] sm:$0xff]
    %v178 = vld [vmem:[%s10 + $0x10] sm:$0xff]
    %v179 = vld [vmem:[%s10 + $0x18] sm:$0xff]
    %v180 = vld [vmem:[%s10 + $0x20] sm:$0xff]
    %v181 = vld [vmem:[%s10 + $0x28] sm:$0xff]
    %v182 = vld [vmem:[%s10 + $0x30] sm:$0xff]
    %v183 = vld [vmem:[%s10 + $0x38] sm:$0xff]
    %v184 = vld [vmem:[%s10 + $0x40] sm:$0xff]
    %v185 = vld [vmem:[%s10 + $0x48] sm:$0xff]
    %v186 = vld [vmem:[%s10 + $0x50] sm:$0xff]
    %v187 = vld [vmem:[%s10 + $0x58] sm:$0xff]
    %v188 = vld [vmem:[%s10 + $0x60] sm:$0xff]
    %v189 = vld [vmem:[%s10 + $0x68] sm:$0xff]
    %v190 = vld [vmem:[%s10 + $0x70] sm:$0xff]
    %v191 = vld [vmem:[%s10 + $0x78] sm:$0xff]
    %v192 = vld [vmem:[%s11] sm:$0x1]
    %v193 = vld [vmem:[%s12] sm:$0xff]
    %v194 = vld [vmem:[%s12 + $0x8] sm:$0xff]
    %v195 = vld [vmem:[%s12 + $0x10] sm:$0xff]
    %v196 = vld [vmem:[%s12 + $0x18] sm:$0xff]
    %v197 = vld [vmem:[%s12 + $0x20] sm:$0xff]
    %v198 = vld [vmem:[%s12 + $0x28] sm:$0xff]
    %v199 = vld [vmem:[%s12 + $0x30] sm:$0xff]
    %v200 = vld [vmem:[%s12 + $0x38] sm:$0xff]
    %v201 = vld [vmem:[%s12 + $0x40] sm:$0xff]
    %v202 = vld [vmem:[%s12 + $0x48] sm:$0xff]
    %v203 = vld [vmem:[%s12 + $0x50] sm:$0xff]
    %v204 = vld [vmem:[%s12 + $0x58] sm:$0xff]
    %v205 = vld [vmem:[%s12 + $0x60] sm:$0xff]
    %v206 = vld [vmem:[%s12 + $0x68] sm:$0xff]
    %v207 = vld [vmem:[%s12 + $0x70] sm:$0xff]
    %v208 = vld [vmem:[%s12 + $0x78] sm:$0xff]
    %v209 = vld [vmem:[%s13] sm:$0x1]
    %v210 = vld [vmem:[#allocation2] sm:$0xff]
    %v211 = vld [vmem:[#allocation2 + $0x8] sm:$0xff]
    %v212 = vld [vmem:[#allocation2 + $0x10] sm:$0xff]
    %v213 = vld [vmem:[#allocation2 + $0x18] sm:$0xff]
    %v214 = vld [vmem:[#allocation2 + $0x20] sm:$0xff]
    %v215 = vld [vmem:[#allocation2 + $0x28] sm:$0xff]
    %v216 = vld [vmem:[#allocation2 + $0x30] sm:$0xff]
    %v217 = vld [vmem:[#allocation2 + $0x38] sm:$0xff]
    %v218 = vld [vmem:[#allocation2 + $0x40] sm:$0xff]
    %v219 = vld [vmem:[#allocation2 + $0x48] sm:$0xff]
    %v220 = vld [vmem:[#allocation2 + $0x50] sm:$0xff]
    %v221 = vld [vmem:[#allocation2 + $0x58] sm:$0xff]
    %v222 = vld [vmem:[#allocation2 + $0x60] sm:$0xff]
    %v223 = vld [vmem:[#allocation2 + $0x68] sm:$0xff]
    %v224 = vld [vmem:[#allocation2 + $0x70] sm:$0xff]
    %v225 = vld [vmem:[#allocation2 + $0x78] sm:$0xff]
    %v226 = vld [vmem:[#allocation4] sm:$0xff]
    %v227 = vld [vmem:[#allocation4 + $0x8] sm:$0xff]
    %v228 = vld [vmem:[#allocation4 + $0x10] sm:$0xff]
    %v229 = vld [vmem:[#allocation4 + $0x18] sm:$0xff]
    %v230 = vld [vmem:[#allocation4 + $0x20] sm:$0xff]
    %v231 = vld [vmem:[#allocation4 + $0x28] sm:$0xff]
    %v232 = vld [vmem:[#allocation4 + $0x30] sm:$0xff]
    %v233 = vld [vmem:[#allocation4 + $0x38] sm:$0xff]
    %v234 = vld [vmem:[#allocation4 + $0x40] sm:$0xff]
    %v235 = vld [vmem:[#allocation4 + $0x48] sm:$0xff]
    %v236 = vld [vmem:[#allocation4 + $0x50] sm:$0xff]
    %v237 = vld [vmem:[#allocation4 + $0x58] sm:$0xff]
    %v238 = vld [vmem:[#allocation4 + $0x60] sm:$0xff]
    %v239 = vld [vmem:[#allocation4 + $0x68] sm:$0xff]
    %v240 = vld [vmem:[#allocation4 + $0x70] sm:$0xff]
    %v241 = vld [vmem:[#allocation4 + $0x78] sm:$0xff]
    %v242 = vld [vmem:[%s16] sm:$0x1]
    %v243 = vld [vmem:[#allocation6] sm:$0xff]
    %v244 = vld [vmem:[#allocation6 + $0x8] sm:$0xff]
    %v245 = vld [vmem:[#allocation6 + $0x10] sm:$0xff]
    %v246 = vld [vmem:[#allocation6 + $0x18] sm:$0xff]
    %v247 = vld [vmem:[#allocation6 + $0x20] sm:$0xff]
    %v248 = vld [vmem:[#allocation6 + $0x28] sm:$0xff]
    %v249 = vld [vmem:[#allocation6 + $0x30] sm:$0xff]
    %v250 = vld [vmem:[#allocation6 + $0x38] sm:$0xff]
    %v251 = vld [vmem:[#allocation6 + $0x40] sm:$0xff]
    %v252 = vld [vmem:[#allocation6 + $0x48] sm:$0xff]
    %v253 = vld [vmem:[#allocation6 + $0x50] sm:$0xff]
    %v254 = vld [vmem:[#allocation6 + $0x58] sm:$0xff]
    %v255 = vld [vmem:[#allocation6 + $0x60] sm:$0xff]
    %v256 = vld [vmem:[#allocation6 + $0x68] sm:$0xff]
    %v257 = vld [vmem:[#allocation6 + $0x70] sm:$0xff]
    %v258 = vld [vmem:[#allocation6 + $0x78] sm:$0xff]
    %v259 = vld [vmem:[%s18] sm:$0x1]
    %v260 = vld [vmem:[#allocation7] sm:$0xff]
    %v261 = vld [vmem:[#allocation7 + $0x8] sm:$0xff]
    %v262 = vld [vmem:[#allocation7 + $0x10] sm:$0xff]
    %v263 = vld [vmem:[#allocation7 + $0x18] sm:$0xff]
    %v264 = vld [vmem:[#allocation7 + $0x20] sm:$0xff]
    %v265 = vld [vmem:[#allocation7 + $0x28] sm:$0xff]
    %v266 = vld [vmem:[#allocation7 + $0x30] sm:$0xff]
    %v267 = vld [vmem:[#allocation7 + $0x38] sm:$0xff]
    %v268 = vld [vmem:[#allocation7 + $0x40] sm:$0xff]
    %v269 = vld [vmem:[#allocation7 + $0x48] sm:$0xff]
    %v270 = vld [vmem:[#allocation7 + $0x50] sm:$0xff]
    %v271 = vld [vmem:[#allocation7 + $0x58] sm:$0xff]
    %v272 = vld [vmem:[#allocation7 + $0x60] sm:$0xff]
    %v273 = vld [vmem:[#allocation7 + $0x68] sm:$0xff]
    %v274 = vld [vmem:[#allocation7 + $0x70] sm:$0xff]
    %v275 = vld [vmem:[#allocation7 + $0x78] sm:$0xff]
    %v276 = vld [vmem:[%s20] sm:$0x1]
    %v277 = vld [vmem:[%s0] sm:$0xff]
    %v278 = vld [vmem:[%s0 + $0x8] sm:$0xff]
    %v279 = vld [vmem:[%s0 + $0x10] sm:$0xff]
    %v280 = vld [vmem:[%s0 + $0x18] sm:$0xff]
    %v281 = vld [vmem:[%s0 + $0x20] sm:$0xff]
    %v282 = vld [vmem:[%s0 + $0x28] sm:$0xff]
    %v283 = vld [vmem:[%s0 + $0x30] sm:$0xff]
    %v284 = vld [vmem:[%s0 + $0x38] sm:$0xff]
    %v285 = vld [vmem:[%s1] sm:$0xff]
    %v286 = vld [vmem:[%s1 + $0x8] sm:$0xff]
    %v287 = vld [vmem:[%s1 + $0x10] sm:$0xff]
    %v288 = vld [vmem:[%s1 + $0x18] sm:$0xff]
    %v289 = vld [vmem:[%s1 + $0x20] sm:$0xff]
    %v290 = vld [vmem:[%s1 + $0x28] sm:$0xff]
    %v291 = vld [vmem:[%s1 + $0x30] sm:$0xff]
    %v292 = vld [vmem:[%s1 + $0x38] sm:$0xff]
    %v294 = vlaneseq
    %v295 = vshrl.u32 %v294, 7
    %v296 = vsub.s32 0, %v295
    %v297 = vrot.slane %v125, %v296
    %vm299 = vcmask 130048
    %v301 = vsel %vm299, %v277, 0
    %v304 = vsel %vm299, %v278, 0
    %v307 = vsel %vm299, %v279, 0
    %v310 = vsel %vm299, %v280, 0
    %v313 = vsel %vm299, %v281, 0
    %v316 = vsel %vm299, %v282, 0
    %v319 = vsel %vm299, %v283, 0
    %v322 = vsel %vm299, %v284, 0
    %v325 = vsel %vm299, %v285, 0
    %v328 = vsel %vm299, %v286, 0
    %v331 = vsel %vm299, %v287, 0
    %v334 = vsel %vm299, %v288, 0
    %v337 = vsel %vm299, %v289, 0
    %v340 = vsel %vm299, %v290, 0
    %v343 = vsel %vm299, %v291, 0
    %v346 = vsel %vm299, %v292, 0
    %348 = vmatprep.subr.mxu0 0.0
    %349 = vmatpush1.msra.mxu0 %v123
    %350 = vmatprep.subr.mxu0 0.0
    %351 = vmatpush1.msra.mxu0 %v124
    %352 = vmatprep.subr.mxu0 0.0
    %353 = vmatpush1.msra.mxu0 0.0
    %354 = vmatprep.subr.mxu0 0.0
    %355 = vmatpush1.msra.mxu0 0.0
    %356 = vmatprep.subr.mxu0 0.0
    %357 = vmatpush1.msra.mxu0 0.0
    %358 = vmatprep.subr.mxu0 0.0
    %359 = vmatpush1.msra.mxu0 0.0
    %360 = vmatprep.subr.mxu0 0.0
    %361 = vmatpush1.msra.mxu0 0.0
    %362 = vmatprep.subr.mxu0 0.0
    %363 = vmatpush1.msra.mxu0 0.0
    %364 = vmatprep.subr.mxu0 0.0
    %365 = vmatpush1.msra.mxu0 0.0
    %366 = vmatprep.subr.mxu0 0.0
    %367 = vmatpush1.msra.mxu0 0.0
    %368 = vmatprep.subr.mxu0 0.0
    %369 = vmatpush1.msra.mxu0 0.0
    %370 = vmatprep.subr.mxu0 0.0
    %371 = vmatpush1.msra.mxu0 0.0
    %372 = vmatprep.subr.mxu0 0.0
    %373 = vmatpush1.msra.mxu0 0.0
    %374 = vmatprep.subr.mxu0 0.0
    %375 = vmatpush1.msra.mxu0 0.0
    %376 = vmatprep.subr.mxu0 0.0
    %377 = vmatpush1.msra.mxu0 0.0
    %378 = vmatprep.subr.mxu0 0.0
    %379 = vmatpush1.msra.mxu0 0.0
    %380 = vmatprep.subr.mxu0 0.0
    %381 = vmatpush1.msra.mxu0 0.0
    %382 = vmatprep.subr.mxu0 0.0
    %383 = vmatpush1.msra.mxu0 0.0
    %384 = vmatprep.subr.mxu0 0.0
    %385 = vmatpush1.msra.mxu0 0.0
    %386 = vmatprep.subr.mxu0 0.0
    %387 = vmatpush1.msra.mxu0 0.0
    %388 = vmatprep.subr.mxu0 0.0
    %389 = vmatpush1.msra.mxu0 0.0
    %390 = vmatprep.subr.mxu0 0.0
    %391 = vmatpush1.msra.mxu0 0.0
    %392 = vmatprep.subr.mxu0 0.0
    %393 = vmatpush1.msra.mxu0 0.0
    %394 = vmatprep.subr.mxu0 0.0
    %395 = vmatpush1.msra.mxu0 0.0
    %396 = vmatprep.subr.mxu0 0.0
    %397 = vmatpush1.msra.mxu0 0.0
    %398 = vmatprep.subr.mxu0 0.0
    %399 = vmatpush1.msra.mxu0 0.0
    %400 = vmatprep.subr.mxu0 0.0
    %401 = vmatpush1.msra.mxu0 0.0
    %402 = vmatprep.subr.mxu0 0.0
    %403 = vmatpush1.msra.mxu0 0.0
    %404 = vmatprep.subr.mxu0 0.0
    %405 = vmatpush1.msra.mxu0 0.0
    %406 = vmatprep.subr.mxu0 0.0
    %407 = vmatpush1.msra.mxu0 0.0
    %408 = vmatprep.subr.mxu0 0.0
    %409 = vmatpush1.msra.mxu0 0.0
    %410 = vmatprep.subr.mxu0 0.0
    %411 = vmatpush1.msra.mxu0 0.0
    %412 = vmatprep.mubr.f32.mxu0 0.0
    %413 = vmatmul.mubr.f32.gmra.mrb[0].mxu0 %v301
    %v414 = vpop.f32.mrb[0].mxu0
    %v415 = vadd.f32 %v297, %v414
    %v416 = vpop.f32.mrb[0].mxu0
    %417 = vmatprep.mubr.f32.mxu0 0.0
    %418 = vmatmul.mubr.f32.gmra.mrb[0].mxu0 %v304
    %v419 = vpop.f32.mrb[0].mxu0
    %v420 = vadd.f32 %v297, %v419
    %v421 = vpop.f32.mrb[0].mxu0
    %422 = vmatprep.mubr.f32.mxu0 0.0
    %423 = vmatmul.mubr.f32.gmra.mrb[0].mxu0 %v307
    %v424 = vpop.f32.mrb[0].mxu0
    %v425 = vadd.f32 %v297, %v424
    %v426 = vpop.f32.mrb[0].mxu0
    %427 = vmatprep.mubr.f32.mxu0 0.0
    %428 = vmatmul.mubr.f32.gmra.mrb[0].mxu0 %v310
    %v429 = vpop.f32.mrb[0].mxu0
    %v430 = vadd.f32 %v297, %v429
    %v431 = vpop.f32.mrb[0].mxu0
    %432 = vmatprep.mubr.f32.mxu0 0.0
    %433 = vmatmul.mubr.f32.gmra.mrb[0].mxu0 %v313
    %v434 = vpop.f32.mrb[0].mxu0
    %v435 = vadd.f32 %v297, %v434
    %v436 = vpop.f32.mrb[0].mxu0
    %437 = vmatprep.mubr.f32.mxu0 0.0
    %438 = vmatmul.mubr.f32.gmra.mrb[0].mxu0 %v316
    %v439 = vpop.f32.mrb[0].mxu0
    %v440 = vadd.f32 %v297, %v439
    %v441 = vpop.f32.mrb[0].mxu0
    %442 = vmatprep.mubr.f32.mxu0 0.0
    %443 = vmatmul.mubr.f32.gmra.mrb[0].mxu0 %v319
    %v444 = vpop.f32.mrb[0].mxu0
    %v445 = vadd.f32 %v297, %v444
    %v446 = vpop.f32.mrb[0].mxu0
    %447 = vmatprep.mubr.f32.mxu0 0.0
    %448 = vmatmul.mubr.f32.gmra.mrb[0].mxu0 %v322
    %v449 = vpop.f32.mrb[0].mxu0
    %v450 = vadd.f32 %v297, %v449
    %v451 = vpop.f32.mrb[0].mxu0
    %452 = vmatprep.mubr.f32.mxu0 0.0
    %453 = vmatmul.mubr.f32.gmra.mrb[0].mxu0 %v325
    %v454 = vpop.f32.mrb[0].mxu0
    %v455 = vadd.f32 %v297, %v454
    %v456 = vpop.f32.mrb[0].mxu0
    %457 = vmatprep.mubr.f32.mxu0 0.0
    %458 = vmatmul.mubr.f32.gmra.mrb[0].mxu0 %v328
    %v459 = vpop.f32.mrb[0].mxu0
    %v460 = vadd.f32 %v297, %v459
    %v461 = vpop.f32.mrb[0].mxu0
    %462 = vmatprep.mubr.f32.mxu0 0.0
    %463 = vmatmul.mubr.f32.gmra.mrb[0].mxu0 %v331
    %v464 = vpop.f32.mrb[0].mxu0
    %v465 = vadd.f32 %v297, %v464
    %v466 = vpop.f32.mrb[0].mxu0
    %467 = vmatprep.mubr.f32.mxu0 0.0
    %468 = vmatmul.mubr.f32.gmra.mrb[0].mxu0 %v334
    %v469 = vpop.f32.mrb[0].mxu0
    %v470 = vadd.f32 %v297, %v469
    %v471 = vpop.f32.mrb[0].mxu0
    %472 = vmatprep.mubr.f32.mxu0 0.0
    %473 = vmatmul.mubr.f32.gmra.mrb[0].mxu0 %v337
    %v474 = vpop.f32.mrb[0].mxu0
    %v475 = vadd.f32 %v297, %v474
    %v476 = vpop.f32.mrb[0].mxu0
    %477 = vmatprep.mubr.f32.mxu0 0.0
    %478 = vmatmul.mubr.f32.gmra.mrb[0].mxu0 %v340
    %v479 = vpop.f32.mrb[0].mxu0
    %v480 = vadd.f32 %v297, %v479
    %v481 = vpop.f32.mrb[0].mxu0
    %482 = vmatprep.mubr.f32.mxu0 0.0
    %483 = vmatmul.mubr.f32.gmra.mrb[0].mxu0 %v343
    %v484 = vpop.f32.mrb[0].mxu0
    %v485 = vadd.f32 %v297, %v484
    %v486 = vpop.f32.mrb[0].mxu0
    %487 = vmatprep.mubr.f32.mxu0 0.0
    %488 = vmatmul.mubr.f32.gmra.mrb[0].mxu0 %v346
    %v489 = vpop.f32.mrb[0].mxu0
    %v490 = vadd.f32 %v297, %v489
    %v491 = vpop.f32.mrb[0].mxu0
    %492 = vdwg.mxu0
    %vm493 = vcmp.gt.f32.partialorder %v415, 0.0
    %vm494 = vcmp.gt.f32.partialorder %v420, 0.0
    %vm495 = vcmp.gt.f32.partialorder %v425, 0.0
    %vm496 = vcmp.gt.f32.partialorder %v430, 0.0
    %vm497 = vcmp.gt.f32.partialorder %v435, 0.0
    %vm498 = vcmp.gt.f32.partialorder %v440, 0.0
    %vm499 = vcmp.gt.f32.partialorder %v445, 0.0
    %vm500 = vcmp.gt.f32.partialorder %v450, 0.0
    %vm501 = vcmp.gt.f32.partialorder %v455, 0.0
    %vm502 = vcmp.gt.f32.partialorder %v460, 0.0
    %vm503 = vcmp.gt.f32.partialorder %v465, 0.0
    %vm504 = vcmp.gt.f32.partialorder %v470, 0.0
    %vm505 = vcmp.gt.f32.partialorder %v475, 0.0
    %vm506 = vcmp.gt.f32.partialorder %v480, 0.0
    %vm507 = vcmp.gt.f32.partialorder %v485, 0.0
    %vm508 = vcmp.gt.f32.partialorder %v490, 0.0
    %v509 = vmul.f32 %v415, 0.01
    %v510 = vmul.f32 %v420, 0.01
    %v511 = vmul.f32 %v425, 0.01
    %v512 = vmul.f32 %v430, 0.01
    %v513 = vmul.f32 %v435, 0.01
    %v514 = vmul.f32 %v440, 0.01
    %v515 = vmul.f32 %v445, 0.01
    %v516 = vmul.f32 %v450, 0.01
    %v517 = vmul.f32 %v455, 0.01
    %v518 = vmul.f32 %v460, 0.01
    %v519 = vmul.f32 %v465, 0.01
    %v520 = vmul.f32 %v470, 0.01
    %v521 = vmul.f32 %v475, 0.01
    %v522 = vmul.f32 %v480, 0.01
    %v523 = vmul.f32 %v485, 0.01
    %v524 = vmul.f32 %v490, 0.01
    %v525 = vsel %vm493, %v415, %v509
    %v526 = vsel %vm494, %v420, %v510
    %v527 = vsel %vm495, %v425, %v511
    %v528 = vsel %vm496, %v430, %v512
    %v529 = vsel %vm497, %v435, %v513
    %v530 = vsel %vm498, %v440, %v514
    %v531 = vsel %vm499, %v445, %v515
    %v532 = vsel %vm500, %v450, %v516
    %v533 = vsel %vm501, %v455, %v517
    %v534 = vsel %vm502, %v460, %v518
    %v535 = vsel %vm503, %v465, %v519
    %v536 = vsel %vm504, %v470, %v520
    %v537 = vsel %vm505, %v475, %v521
    %v538 = vsel %vm506, %v480, %v522
    %v539 = vsel %vm507, %v485, %v523
    %v540 = vsel %vm508, %v490, %v524
    %v542 = vlaneseq
    %v543 = vshrl.u32 %v542, 7
    %v544 = vsub.s32 0, %v543
    %v545 = vrot.slane %v142, %v544
    %547 = vmatprep.subr.mxu0 0.0
    %548 = vmatpush1.msra.mxu0 %v126
    %549 = vmatprep.subr.mxu0 0.0
    %550 = vmatpush1.msra.mxu0 %v127
    %551 = vmatprep.subr.mxu0 0.0
    %552 = vmatpush1.msra.mxu0 %v128
    %553 = vmatprep.subr.mxu0 0.0
    %554 = vmatpush1.msra.mxu0 %v129
    %555 = vmatprep.subr.mxu0 0.0
    %556 = vmatpush1.msra.mxu0 %v130
    %557 = vmatprep.subr.mxu0 0.0
    %558 = vmatpush1.msra.mxu0 %v131
    %559 = vmatprep.subr.mxu0 0.0
    %560 = vmatpush1.msra.mxu0 %v132
    %561 = vmatprep.subr.mxu0 0.0
    %562 = vmatpush1.msra.mxu0 %v133
    %563 = vmatprep.subr.mxu0 0.0
    %564 = vmatpush1.msra.mxu0 %v134
    %565 = vmatprep.subr.mxu0 0.0
    %566 = vmatpush1.msra.mxu0 %v135
    %567 = vmatprep.subr.mxu0 0.0
    %568 = vmatpush1.msra.mxu0 %v136
    %569 = vmatprep.subr.mxu0 0.0
    %570 = vmatpush1.msra.mxu0 %v137
    %571 = vmatprep.subr.mxu0 0.0
    %572 = vmatpush1.msra.mxu0 %v138
    %573 = vmatprep.subr.mxu0 0.0
    %574 = vmatpush1.msra.mxu0 %v139
    %575 = vmatprep.subr.mxu0 0.0
    %576 = vmatpush1.msra.mxu0 %v140
    %577 = vmatprep.subr.mxu0 0.0
    %578 = vmatpush1.msra.mxu0 %v141
    %579 = vmatprep.subr.mxu0 0.0
    %580 = vmatpush1.msra.mxu0 0.0
    %581 = vmatprep.subr.mxu0 0.0
    %582 = vmatpush1.msra.mxu0 0.0
    %583 = vmatprep.subr.mxu0 0.0
    %584 = vmatpush1.msra.mxu0 0.0
    %585 = vmatprep.subr.mxu0 0.0
    %586 = vmatpush1.msra.mxu0 0.0
    %587 = vmatprep.subr.mxu0 0.0
    %588 = vmatpush1.msra.mxu0 0.0
    %589 = vmatprep.subr.mxu0 0.0
    %590 = vmatpush1.msra.mxu0 0.0
    %591 = vmatprep.subr.mxu0 0.0
    %592 = vmatpush1.msra.mxu0 0.0
    %593 = vmatprep.subr.mxu0 0.0
    %594 = vmatpush1.msra.mxu0 0.0
    %595 = vmatprep.subr.mxu0 0.0
    %596 = vmatpush1.msra.mxu0 0.0
    %597 = vmatprep.subr.mxu0 0.0
    %598 = vmatpush1.msra.mxu0 0.0
    %599 = vmatprep.subr.mxu0 0.0
    %600 = vmatpush1.msra.mxu0 0.0
    %601 = vmatprep.subr.mxu0 0.0
    %602 = vmatpush1.msra.mxu0 0.0
    %603 = vmatprep.subr.mxu0 0.0
    %604 = vmatpush1.msra.mxu0 0.0
    %605 = vmatprep.subr.mxu0 0.0
    %606 = vmatpush1.msra.mxu0 0.0
    %607 = vmatprep.subr.mxu0 0.0
    %608 = vmatpush1.msra.mxu0 0.0
    %609 = vmatprep.subr.mxu0 0.0
    %610 = vmatpush1.msra.mxu0 0.0
    %611 = vmatprep.mubr.f32.mxu0 0.0
    %612 = vmatmul.mubr.f32.gmra.mrb[0].mxu0 %v525
    %v613 = vpop.f32.mrb[0].mxu0
    %v614 = vadd.f32 %v545, %v613
    %v615 = vpop.f32.mrb[0].mxu0
    %616 = vmatprep.mubr.f32.mxu0 0.0
    %617 = vmatmul.mubr.f32.gmra.mrb[0].mxu0 %v526
    %v618 = vpop.f32.mrb[0].mxu0
    %v619 = vadd.f32 %v545, %v618
    %v620 = vpop.f32.mrb[0].mxu0
    %621 = vmatprep.mubr.f32.mxu0 0.0
    %622 = vmatmul.mubr.f32.gmra.mrb[0].mxu0 %v527
    %v623 = vpop.f32.mrb[0].mxu0
    %v624 = vadd.f32 %v545, %v623
    %v625 = vpop.f32.mrb[0].mxu0
    %626 = vmatprep.mubr.f32.mxu0 0.0
    %627 = vmatmul.mubr.f32.gmra.mrb[0].mxu0 %v528
    %v628 = vpop.f32.mrb[0].mxu0
    %v629 = vadd.f32 %v545, %v628
    %v630 = vpop.f32.mrb[0].mxu0
    %631 = vmatprep.mubr.f32.mxu0 0.0
    %632 = vmatmul.mubr.f32.gmra.mrb[0].mxu0 %v529
    %v633 = vpop.f32.mrb[0].mxu0
    %v634 = vadd.f32 %v545, %v633
    %v635 = vpop.f32.mrb[0].mxu0
    %636 = vmatprep.mubr.f32.mxu0 0.0
    %637 = vmatmul.mubr.f32.gmra.mrb[0].mxu0 %v530
    %v638 = vpop.f32.mrb[0].mxu0
    %v639 = vadd.f32 %v545, %v638
    %v640 = vpop.f32.mrb[0].mxu0
    %641 = vmatprep.mubr.f32.mxu0 0.0
    %642 = vmatmul.mubr.f32.gmra.mrb[0].mxu0 %v531
    %v643 = vpop.f32.mrb[0].mxu0
    %v644 = vadd.f32 %v545, %v643
    %v645 = vpop.f32.mrb[0].mxu0
    %646 = vmatprep.mubr.f32.mxu0 0.0
    %647 = vmatmul.mubr.f32.gmra.mrb[0].mxu0 %v532
    %v648 = vpop.f32.mrb[0].mxu0
    %v649 = vadd.f32 %v545, %v648
    %v650 = vpop.f32.mrb[0].mxu0
    %651 = vmatprep.mubr.f32.mxu0 0.0
    %652 = vmatmul.mubr.f32.gmra.mrb[0].mxu0 %v533
    %v653 = vpop.f32.mrb[0].mxu0
    %v654 = vadd.f32 %v545, %v653
    %v655 = vpop.f32.mrb[0].mxu0
    %656 = vmatprep.mubr.f32.mxu0 0.0
    %657 = vmatmul.mubr.f32.gmra.mrb[0].mxu0 %v534
    %v658 = vpop.f32.mrb[0].mxu0
    %v659 = vadd.f32 %v545, %v658
    %v660 = vpop.f32.mrb[0].mxu0
    %661 = vmatprep.mubr.f32.mxu0 0.0
    %662 = vmatmul.mubr.f32.gmra.mrb[0].mxu0 %v535
    %v663 = vpop.f32.mrb[0].mxu0
    %v664 = vadd.f32 %v545, %v663
    %v665 = vpop.f32.mrb[0].mxu0
    %666 = vmatprep.mubr.f32.mxu0 0.0
    %667 = vmatmul.mubr.f32.gmra.mrb[0].mxu0 %v536
    %v668 = vpop.f32.mrb[0].mxu0
    %v669 = vadd.f32 %v545, %v668
    %v670 = vpop.f32.mrb[0].mxu0
    %671 = vmatprep.mubr.f32.mxu0 0.0
    %672 = vmatmul.mubr.f32.gmra.mrb[0].mxu0 %v537
    %v673 = vpop.f32.mrb[0].mxu0
    %v674 = vadd.f32 %v545, %v673
    %v675 = vpop.f32.mrb[0].mxu0
    %676 = vmatprep.mubr.f32.mxu0 0.0
    %677 = vmatmul.mubr.f32.gmra.mrb[0].mxu0 %v538
    %v678 = vpop.f32.mrb[0].mxu0
    %v679 = vadd.f32 %v545, %v678
    %v680 = vpop.f32.mrb[0].mxu0
    %681 = vmatprep.mubr.f32.mxu0 0.0
    %682 = vmatmul.mubr.f32.gmra.mrb[0].mxu0 %v539
    %v683 = vpop.f32.mrb[0].mxu0
    %v684 = vadd.f32 %v545, %v683
    %v685 = vpop.f32.mrb[0].mxu0
    %686 = vmatprep.mubr.f32.mxu0 0.0
    %687 = vmatmul.mubr.f32.gmra.mrb[0].mxu0 %v540
    %v688 = vpop.f32.mrb[0].mxu0
    %v689 = vadd.f32 %v545, %v688
    %v690 = vpop.f32.mrb[0].mxu0
    %691 = vdwg.mxu0
    %vm692 = vcmp.gt.f32.partialorder %v614, 0.0
    %vm693 = vcmp.gt.f32.partialorder %v619, 0.0
    %vm694 = vcmp.gt.f32.partialorder %v624, 0.0
    %vm695 = vcmp.gt.f32.partialorder %v629, 0.0
    %vm696 = vcmp.gt.f32.partialorder %v634, 0.0
    %vm697 = vcmp.gt.f32.partialorder %v639, 0.0
    %vm698 = vcmp.gt.f32.partialorder %v644, 0.0
    %vm699 = vcmp.gt.f32.partialorder %v649, 0.0
    %vm700 = vcmp.gt.f32.partialorder %v654, 0.0
    %vm701 = vcmp.gt.f32.partialorder %v659, 0.0
    %vm702 = vcmp.gt.f32.partialorder %v664, 0.0
    %vm703 = vcmp.gt.f32.partialorder %v669, 0.0
    %vm704 = vcmp.gt.f32.partialorder %v674, 0.0
    %vm705 = vcmp.gt.f32.partialorder %v679, 0.0
    %vm706 = vcmp.gt.f32.partialorder %v684, 0.0
    %vm707 = vcmp.gt.f32.partialorder %v689, 0.0
    %v708 = vmul.f32 %v614, 0.01
    %v709 = vmul.f32 %v619, 0.01
    %v710 = vmul.f32 %v624, 0.01
    %v711 = vmul.f32 %v629, 0.01
    %v712 = vmul.f32 %v634, 0.01
    %v713 = vmul.f32 %v639, 0.01
    %v714 = vmul.f32 %v644, 0.01
    %v715 = vmul.f32 %v649, 0.01
    %v716 = vmul.f32 %v654, 0.01
    %v717 = vmul.f32 %v659, 0.01
    %v718 = vmul.f32 %v664, 0.01
    %v719 = vmul.f32 %v669, 0.01
    %v720 = vmul.f32 %v674, 0.01
    %v721 = vmul.f32 %v679, 0.01
    %v722 = vmul.f32 %v684, 0.01
    %v723 = vmul.f32 %v689, 0.01
    %v724 = vsel %vm692, %v614, %v708
    %v725 = vsel %vm693, %v619, %v709
    %v726 = vsel %vm694, %v624, %v710
    %v727 = vsel %vm695, %v629, %v711
    %v728 = vsel %vm696, %v634, %v712
    %v729 = vsel %vm697, %v639, %v713
    %v730 = vsel %vm698, %v644, %v714
    %v731 = vsel %vm699, %v649, %v715
    %v732 = vsel %vm700, %v654, %v716
    %v733 = vsel %vm701, %v659, %v717
    %v734 = vsel %vm702, %v664, %v718
    %v735 = vsel %vm703, %v669, %v719
    %v736 = vsel %vm704, %v674, %v720
    %v737 = vsel %vm705, %v679, %v721
    %v738 = vsel %vm706, %v684, %v722
    %v739 = vsel %vm707, %v689, %v723
    %v741 = vlaneseq
    %v742 = vshrl.u32 %v741, 7
    %v743 = vsub.s32 0, %v742
    %v744 = vrot.slane %v159, %v743
    %746 = vmatprep.subr.mxu0 0.0
    %747 = vmatpush1.msra.mxu0 %v143
    %748 = vmatprep.subr.mxu0 0.0
    %749 = vmatpush1.msra.mxu0 %v144
    %750 = vmatprep.subr.mxu0 0.0
    %751 = vmatpush1.msra.mxu0 %v145
    %752 = vmatprep.subr.mxu0 0.0
    %753 = vmatpush1.msra.mxu0 %v146
    %754 = vmatprep.subr.mxu0 0.0
    %755 = vmatpush1.msra.mxu0 %v147
    %756 = vmatprep.subr.mxu0 0.0
    %757 = vmatpush1.msra.mxu0 %v148
    %758 = vmatprep.subr.mxu0 0.0
    %759 = vmatpush1.msra.mxu0 %v149
    %760 = vmatprep.subr.mxu0 0.0
    %761 = vmatpush1.msra.mxu0 %v150
    %762 = vmatprep.subr.mxu0 0.0
    %763 = vmatpush1.msra.mxu0 %v151
    %764 = vmatprep.subr.mxu0 0.0
    %765 = vmatpush1.msra.mxu0 %v152
    %766 = vmatprep.subr.mxu0 0.0
    %767 = vmatpush1.msra.mxu0 %v153
    %768 = vmatprep.subr.mxu0 0.0
    %769 = vmatpush1.msra.mxu0 %v154
    %770 = vmatprep.subr.mxu0 0.0
    %771 = vmatpush1.msra.mxu0 %v155
    %772 = vmatprep.subr.mxu0 0.0
    %773 = vmatpush1.msra.mxu0 %v156
    %774 = vmatprep.subr.mxu0 0.0
    %775 = vmatpush1.msra.mxu0 %v157
    %776 = vmatprep.subr.mxu0 0.0
    %777 = vmatpush1.msra.mxu0 %v158
    %778 = vmatprep.subr.mxu0 0.0
    %779 = vmatpush1.msra.mxu0 0.0
    %780 = vmatprep.subr.mxu0 0.0
    %781 = vmatpush1.msra.mxu0 0.0
    %782 = vmatprep.subr.mxu0 0.0
    %783 = vmatpush1.msra.mxu0 0.0
    %784 = vmatprep.subr.mxu0 0.0
    %785 = vmatpush1.msra.mxu0 0.0
    %786 = vmatprep.subr.mxu0 0.0
    %787 = vmatpush1.msra.mxu0 0.0
    %788 = vmatprep.subr.mxu0 0.0
    %789 = vmatpush1.msra.mxu0 0.0
    %790 = vmatprep.subr.mxu0 0.0
    %791 = vmatpush1.msra.mxu0 0.0
    %792 = vmatprep.subr.mxu0 0.0
    %793 = vmatpush1.msra.mxu0 0.0
    %794 = vmatprep.subr.mxu0 0.0
    %795 = vmatpush1.msra.mxu0 0.0
    %796 = vmatprep.subr.mxu0 0.0
    %797 = vmatpush1.msra.mxu0 0.0
    %798 = vmatprep.subr.mxu0 0.0
    %799 = vmatpush1.msra.mxu0 0.0
    %800 = vmatprep.subr.mxu0 0.0
    %801 = vmatpush1.msra.mxu0 0.0
    %802 = vmatprep.subr.mxu0 0.0
    %803 = vmatpush1.msra.mxu0 0.0
    %804 = vmatprep.subr.mxu0 0.0
    %805 = vmatpush1.msra.mxu0 0.0
    %806 = vmatprep.subr.mxu0 0.0
    %807 = vmatpush1.msra.mxu0 0.0
    %808 = vmatprep.subr.mxu0 0.0
    %809 = vmatpush1.msra.mxu0 0.0
    %810 = vmatprep.mubr.f32.mxu0 0.0
    %811 = vmatmul.mubr.f32.gmra.mrb[0].mxu0 %v724
    %v812 = vpop.f32.mrb[0].mxu0
    %v813 = vadd.f32 %v744, %v812
    %v814 = vpop.f32.mrb[0].mxu0
    %815 = vmatprep.mubr.f32.mxu0 0.0
    %816 = vmatmul.mubr.f32.gmra.mrb[0].mxu0 %v725
    %v817 = vpop.f32.mrb[0].mxu0
    %v818 = vadd.f32 %v744, %v817
    %v819 = vpop.f32.mrb[0].mxu0
    %820 = vmatprep.mubr.f32.mxu0 0.0
    %821 = vmatmul.mubr.f32.gmra.mrb[0].mxu0 %v726
    %v822 = vpop.f32.mrb[0].mxu0
    %v823 = vadd.f32 %v744, %v822
    %v824 = vpop.f32.mrb[0].mxu0
    %825 = vmatprep.mubr.f32.mxu0 0.0
    %826 = vmatmul.mubr.f32.gmra.mrb[0].mxu0 %v727
    %v827 = vpop.f32.mrb[0].mxu0
    %v828 = vadd.f32 %v744, %v827
    %v829 = vpop.f32.mrb[0].mxu0
    %830 = vmatprep.mubr.f32.mxu0 0.0
    %831 = vmatmul.mubr.f32.gmra.mrb[0].mxu0 %v728
    %v832 = vpop.f32.mrb[0].mxu0
    %v833 = vadd.f32 %v744, %v832
    %v834 = vpop.f32.mrb[0].mxu0
    %835 = vmatprep.mubr.f32.mxu0 0.0
    %836 = vmatmul.mubr.f32.gmra.mrb[0].mxu0 %v729
    %v837 = vpop.f32.mrb[0].mxu0
    %v838 = vadd.f32 %v744, %v837
    %v839 = vpop.f32.mrb[0].mxu0
    %840 = vmatprep.mubr.f32.mxu0 0.0
    %841 = vmatmul.mubr.f32.gmra.mrb[0].mxu0 %v730
    %v842 = vpop.f32.mrb[0].mxu0
    %v843 = vadd.f32 %v744, %v842
    %v844 = vpop.f32.mrb[0].mxu0
    %845 = vmatprep.mubr.f32.mxu0 0.0
    %846 = vmatmul.mubr.f32.gmra.mrb[0].mxu0 %v731
    %v847 = vpop.f32.mrb[0].mxu0
    %v848 = vadd.f32 %v744, %v847
    %v849 = vpop.f32.mrb[0].mxu0
    %850 = vmatprep.mubr.f32.mxu0 0.0
    %851 = vmatmul.mubr.f32.gmra.mrb[0].mxu0 %v732
    %v852 = vpop.f32.mrb[0].mxu0
    %v853 = vadd.f32 %v744, %v852
    %v854 = vpop.f32.mrb[0].mxu0
    %855 = vmatprep.mubr.f32.mxu0 0.0
    %856 = vmatmul.mubr.f32.gmra.mrb[0].mxu0 %v733
    %v857 = vpop.f32.mrb[0].mxu0
    %v858 = vadd.f32 %v744, %v857
    %v859 = vpop.f32.mrb[0].mxu0
    %860 = vmatprep.mubr.f32.mxu0 0.0
    %861 = vmatmul.mubr.f32.gmra.mrb[0].mxu0 %v734
    %v862 = vpop.f32.mrb[0].mxu0
    %v863 = vadd.f32 %v744, %v862
    %v864 = vpop.f32.mrb[0].mxu0
    %865 = vmatprep.mubr.f32.mxu0 0.0
    %866 = vmatmul.mubr.f32.gmra.mrb[0].mxu0 %v735
    %v867 = vpop.f32.mrb[0].mxu0
    %v868 = vadd.f32 %v744, %v867
    %v869 = vpop.f32.mrb[0].mxu0
    %870 = vmatprep.mubr.f32.mxu0 0.0
    %871 = vmatmul.mubr.f32.gmra.mrb[0].mxu0 %v736
    %v872 = vpop.f32.mrb[0].mxu0
    %v873 = vadd.f32 %v744, %v872
    %v874 = vpop.f32.mrb[0].mxu0
    %875 = vmatprep.mubr.f32.mxu0 0.0
    %876 = vmatmul.mubr.f32.gmra.mrb[0].mxu0 %v737
    %v877 = vpop.f32.mrb[0].mxu0
    %v878 = vadd.f32 %v744, %v877
    %v879 = vpop.f32.mrb[0].mxu0
    %880 = vmatprep.mubr.f32.mxu0 0.0
    %881 = vmatmul.mubr.f32.gmra.mrb[0].mxu0 %v738
    %v882 = vpop.f32.mrb[0].mxu0
    %v883 = vadd.f32 %v744, %v882
    %v884 = vpop.f32.mrb[0].mxu0
    %885 = vmatprep.mubr.f32.mxu0 0.0
    %886 = vmatmul.mubr.f32.gmra.mrb[0].mxu0 %v739
    %v887 = vpop.f32.mrb[0].mxu0
    %v888 = vadd.f32 %v744, %v887
    %v889 = vpop.f32.mrb[0].mxu0
    %890 = vdwg.mxu0
    %v891 = vld [vmem:[%s2] sm:$0xff]
    %v892 = vld [vmem:[%s2 + $0x8] sm:$0xff]
    %v893 = vld [vmem:[%s2 + $0x10] sm:$0xff]
    %v894 = vld [vmem:[%s2 + $0x18] sm:$0xff]
    %v895 = vld [vmem:[%s2 + $0x20] sm:$0xff]
    %v896 = vld [vmem:[%s2 + $0x28] sm:$0xff]
    %v897 = vld [vmem:[%s2 + $0x30] sm:$0xff]
    %v898 = vld [vmem:[%s2 + $0x38] sm:$0xff]
    %899 = vmatprep.subr.mxu0 0.0
    %900 = vmatpush1.msra.mxu0 %v160
    %901 = vmatprep.subr.mxu0 0.0
    %902 = vmatpush1.msra.mxu0 %v161
    %903 = vmatprep.subr.mxu0 0.0
    %904 = vmatpush1.msra.mxu0 %v162
    %905 = vmatprep.subr.mxu0 0.0
    %906 = vmatpush1.msra.mxu0 %v163
    %907 = vmatprep.subr.mxu0 0.0
    %908 = vmatpush1.msra.mxu0 %v164
    %909 = vmatprep.subr.mxu0 0.0
    %910 = vmatpush1.msra.mxu0 %v165
    %911 = vmatprep.subr.mxu0 0.0
    %912 = vmatpush1.msra.mxu0 %v166
    %913 = vmatprep.subr.mxu0 0.0
    %914 = vmatpush1.msra.mxu0 %v167
    %915 = vmatprep.subr.mxu0 0.0
    %916 = vmatpush1.msra.mxu0 %v168
    %917 = vmatprep.subr.mxu0 0.0
    %918 = vmatpush1.msra.mxu0 %v169
    %919 = vmatprep.subr.mxu0 0.0
    %920 = vmatpush1.msra.mxu0 %v170
    %921 = vmatprep.subr.mxu0 0.0
    %922 = vmatpush1.msra.mxu0 %v171
    %923 = vmatprep.subr.mxu0 0.0
    %924 = vmatpush1.msra.mxu0 %v172
    %925 = vmatprep.subr.mxu0 0.0
    %926 = vmatpush1.msra.mxu0 %v173
    %927 = vmatprep.subr.mxu0 0.0
    %928 = vmatpush1.msra.mxu0 %v174
    %929 = vmatprep.subr.mxu0 0.0
    %930 = vmatpush1.msra.mxu0 %v175
    %931 = vmatprep.subr.mxu0 0.0
    %932 = vmatpush1.msra.mxu0 0.0
    %933 = vmatprep.subr.mxu0 0.0
    %934 = vmatpush1.msra.mxu0 0.0
    %935 = vmatprep.subr.mxu0 0.0
    %936 = vmatpush1.msra.mxu0 0.0
    %937 = vmatprep.subr.mxu0 0.0
    %938 = vmatpush1.msra.mxu0 0.0
    %939 = vmatprep.subr.mxu0 0.0
    %940 = vmatpush1.msra.mxu0 0.0
    %941 = vmatprep.subr.mxu0 0.0
    %942 = vmatpush1.msra.mxu0 0.0
    %943 = vmatprep.subr.mxu0 0.0
    %944 = vmatpush1.msra.mxu0 0.0
    %945 = vmatprep.subr.mxu0 0.0
    %946 = vmatpush1.msra.mxu0 0.0
    %947 = vmatprep.subr.mxu0 0.0
    %948 = vmatpush1.msra.mxu0 0.0
    %949 = vmatprep.subr.mxu0 0.0
    %950 = vmatpush1.msra.mxu0 0.0
    %951 = vmatprep.subr.mxu0 0.0
    %952 = vmatpush1.msra.mxu0 0.0
    %953 = vmatprep.subr.mxu0 0.0
    %954 = vmatpush1.msra.mxu0 0.0
    %955 = vmatprep.subr.mxu0 0.0
    %956 = vmatpush1.msra.mxu0 0.0
    %957 = vmatprep.subr.mxu0 0.0
    %958 = vmatpush1.msra.mxu0 0.0
    %959 = vmatprep.subr.mxu0 0.0
    %960 = vmatpush1.msra.mxu0 0.0
    %961 = vmatprep.subr.mxu0 0.0
    %962 = vmatpush1.msra.mxu0 0.0
    %963 = vmatprep.mubr.f32.mxu0 0.0
    %964 = vmatmul.mubr.f32.gmra.mrb[0].mxu0 %v813
    %v965 = vpop.f32.mrb[0].mxu0
    %v966 = vadd.f32 %v891, %v965
    %v967 = vpop.f32.mrb[0].mxu0
    %968 = vmatprep.mubr.f32.mxu0 0.0
    %969 = vmatmul.mubr.f32.gmra.mrb[0].mxu0 %v818
    %v970 = vpop.f32.mrb[0].mxu0
    %v971 = vadd.f32 %v892, %v970
    %v972 = vpop.f32.mrb[0].mxu0
    %973 = vmatprep.mubr.f32.mxu0 0.0
    %974 = vmatmul.mubr.f32.gmra.mrb[0].mxu0 %v823
    %v975 = vpop.f32.mrb[0].mxu0
    %v976 = vadd.f32 %v893, %v975
    %v977 = vpop.f32.mrb[0].mxu0
    %978 = vmatprep.mubr.f32.mxu0 0.0
    %979 = vmatmul.mubr.f32.gmra.mrb[0].mxu0 %v828
    %v980 = vpop.f32.mrb[0].mxu0
    %v981 = vadd.f32 %v894, %v980
    %v982 = vpop.f32.mrb[0].mxu0
    %983 = vmatprep.mubr.f32.mxu0 0.0
    %984 = vmatmul.mubr.f32.gmra.mrb[0].mxu0 %v833
    %v985 = vpop.f32.mrb[0].mxu0
    %v986 = vadd.f32 %v895, %v985
    %v987 = vpop.f32.mrb[0].mxu0
    %988 = vmatprep.mubr.f32.mxu0 0.0
    %989 = vmatmul.mubr.f32.gmra.mrb[0].mxu0 %v838
    %v990 = vpop.f32.mrb[0].mxu0
    %v991 = vadd.f32 %v896, %v990
    %v992 = vpop.f32.mrb[0].mxu0
    %993 = vmatprep.mubr.f32.mxu0 0.0
    %994 = vmatmul.mubr.f32.gmra.mrb[0].mxu0 %v843
    %v995 = vpop.f32.mrb[0].mxu0
    %v996 = vadd.f32 %v897, %v995
    %v997 = vpop.f32.mrb[0].mxu0
    %998 = vmatprep.mubr.f32.mxu0 0.0
    %999 = vmatmul.mubr.f32.gmra.mrb[0].mxu0 %v848
    %v1000 = vpop.f32.mrb[0].mxu0
    %v1001 = vadd.f32 %v898, %v1000
    %v1002 = vpop.f32.mrb[0].mxu0
    %1003 = vdwg.mxu0
    %vm1004 = vcmp.gt.f32.partialorder %v966, 0.0
    %vm1005 = vcmp.gt.f32.partialorder %v971, 0.0
    %vm1006 = vcmp.gt.f32.partialorder %v976, 0.0
    %vm1007 = vcmp.gt.f32.partialorder %v981, 0.0
    %vm1008 = vcmp.gt.f32.partialorder %v986, 0.0
    %vm1009 = vcmp.gt.f32.partialorder %v991, 0.0
    %vm1010 = vcmp.gt.f32.partialorder %v996, 0.0
    %vm1011 = vcmp.gt.f32.partialorder %v1001, 0.0
    %v1012 = vmul.f32 %v966, 0.01
    %v1013 = vmul.f32 %v971, 0.01
    %v1014 = vmul.f32 %v976, 0.01
    %v1015 = vmul.f32 %v981, 0.01
    %v1016 = vmul.f32 %v986, 0.01
    %v1017 = vmul.f32 %v991, 0.01
    %v1018 = vmul.f32 %v996, 0.01
    %v1019 = vmul.f32 %v1001, 0.01
    %v1020 = vsel %vm1004, %v966, %v1012
    %v1021 = vsel %vm1005, %v971, %v1013
    %v1022 = vsel %vm1006, %v976, %v1014
    %v1023 = vsel %vm1007, %v981, %v1015
    %v1024 = vsel %vm1008, %v986, %v1016
    %v1025 = vsel %vm1009, %v991, %v1017
    %v1026 = vsel %vm1010, %v996, %v1018
    %v1027 = vsel %vm1011, %v1001, %v1019
    %v1029 = vlaneseq
    %v1030 = vshrl.u32 %v1029, 7
    %v1031 = vsub.s32 0, %v1030
    %v1032 = vrot.slane %v192, %v1031
    %1034 = vmatprep.subr.mxu0 0.0
    %1035 = vmatpush1.msra.mxu0 %v176
    %1036 = vmatprep.subr.mxu0 0.0
    %1037 = vmatpush1.msra.mxu0 %v177
    %1038 = vmatprep.subr.mxu0 0.0
    %1039 = vmatpush1.msra.mxu0 %v178
    %1040 = vmatprep.subr.mxu0 0.0
    %1041 = vmatpush1.msra.mxu0 %v179
    %1042 = vmatprep.subr.mxu0 0.0
    %1043 = vmatpush1.msra.mxu0 %v180
    %1044 = vmatprep.subr.mxu0 0.0
    %1045 = vmatpush1.msra.mxu0 %v181
    %1046 = vmatprep.subr.mxu0 0.0
    %1047 = vmatpush1.msra.mxu0 %v182
    %1048 = vmatprep.subr.mxu0 0.0
    %1049 = vmatpush1.msra.mxu0 %v183
    %1050 = vmatprep.subr.mxu0 0.0
    %1051 = vmatpush1.msra.mxu0 %v184
    %1052 = vmatprep.subr.mxu0 0.0
    %1053 = vmatpush1.msra.mxu0 %v185
    %1054 = vmatprep.subr.mxu0 0.0
    %1055 = vmatpush1.msra.mxu0 %v186
    %1056 = vmatprep.subr.mxu0 0.0
    %1057 = vmatpush1.msra.mxu0 %v187
    %1058 = vmatprep.subr.mxu0 0.0
    %1059 = vmatpush1.msra.mxu0 %v188
    %1060 = vmatprep.subr.mxu0 0.0
    %1061 = vmatpush1.msra.mxu0 %v189
    %1062 = vmatprep.subr.mxu0 0.0
    %1063 = vmatpush1.msra.mxu0 %v190
    %1064 = vmatprep.subr.mxu0 0.0
    %1065 = vmatpush1.msra.mxu0 %v191
    %1066 = vmatprep.subr.mxu0 0.0
    %1067 = vmatpush1.msra.mxu0 0.0
    %1068 = vmatprep.subr.mxu0 0.0
    %1069 = vmatpush1.msra.mxu0 0.0
    %1070 = vmatprep.subr.mxu0 0.0
    %1071 = vmatpush1.msra.mxu0 0.0
    %1072 = vmatprep.subr.mxu0 0.0
    %1073 = vmatpush1.msra.mxu0 0.0
    %1074 = vmatprep.subr.mxu0 0.0
    %1075 = vmatpush1.msra.mxu0 0.0
    %1076 = vmatprep.subr.mxu0 0.0
    %1077 = vmatpush1.msra.mxu0 0.0
    %1078 = vmatprep.subr.mxu0 0.0
    %1079 = vmatpush1.msra.mxu0 0.0
    %1080 = vmatprep.subr.mxu0 0.0
    %1081 = vmatpush1.msra.mxu0 0.0
    %1082 = vmatprep.subr.mxu0 0.0
    %1083 = vmatpush1.msra.mxu0 0.0
    %1084 = vmatprep.subr.mxu0 0.0
    %1085 = vmatpush1.msra.mxu0 0.0
    %1086 = vmatprep.subr.mxu0 0.0
    %1087 = vmatpush1.msra.mxu0 0.0
    %1088 = vmatprep.subr.mxu0 0.0
    %1089 = vmatpush1.msra.mxu0 0.0
    %1090 = vmatprep.subr.mxu0 0.0
    %1091 = vmatpush1.msra.mxu0 0.0
    %1092 = vmatprep.subr.mxu0 0.0
    %1093 = vmatpush1.msra.mxu0 0.0
    %1094 = vmatprep.subr.mxu0 0.0
    %1095 = vmatpush1.msra.mxu0 0.0
    %1096 = vmatprep.subr.mxu0 0.0
    %1097 = vmatpush1.msra.mxu0 0.0
    %1098 = vmatprep.mubr.f32.mxu0 0.0
    %1099 = vmatmul.mubr.f32.gmra.mrb[0].mxu0 %v1020
    %v1100 = vpop.f32.mrb[0].mxu0
    %v1101 = vadd.f32 %v1032, %v1100
    %v1102 = vpop.f32.mrb[0].mxu0
    %1103 = vmatprep.mubr.f32.mxu0 0.0
    %1104 = vmatmul.mubr.f32.gmra.mrb[0].mxu0 %v1021
    %v1105 = vpop.f32.mrb[0].mxu0
    %v1106 = vadd.f32 %v1032, %v1105
    %v1107 = vpop.f32.mrb[0].mxu0
    %1108 = vmatprep.mubr.f32.mxu0 0.0
    %1109 = vmatmul.mubr.f32.gmra.mrb[0].mxu0 %v1022
    %v1110 = vpop.f32.mrb[0].mxu0
    %v1111 = vadd.f32 %v1032, %v1110
    %v1112 = vpop.f32.mrb[0].mxu0
    %1113 = vmatprep.mubr.f32.mxu0 0.0
    %1114 = vmatmul.mubr.f32.gmra.mrb[0].mxu0 %v1023
    %v1115 = vpop.f32.mrb[0].mxu0
    %v1116 = vadd.f32 %v1032, %v1115
    %v1117 = vpop.f32.mrb[0].mxu0
    %1118 = vmatprep.mubr.f32.mxu0 0.0
    %1119 = vmatmul.mubr.f32.gmra.mrb[0].mxu0 %v1024
    %v1120 = vpop.f32.mrb[0].mxu0
    %v1121 = vadd.f32 %v1032, %v1120
    %v1122 = vpop.f32.mrb[0].mxu0
    %1123 = vmatprep.mubr.f32.mxu0 0.0
    %1124 = vmatmul.mubr.f32.gmra.mrb[0].mxu0 %v1025
    %v1125 = vpop.f32.mrb[0].mxu0
    %v1126 = vadd.f32 %v1032, %v1125
    %v1127 = vpop.f32.mrb[0].mxu0
    %1128 = vmatprep.mubr.f32.mxu0 0.0
    %1129 = vmatmul.mubr.f32.gmra.mrb[0].mxu0 %v1026
    %v1130 = vpop.f32.mrb[0].mxu0
    %v1131 = vadd.f32 %v1032, %v1130
    %v1132 = vpop.f32.mrb[0].mxu0
    %1133 = vmatprep.mubr.f32.mxu0 0.0
    %1134 = vmatmul.mubr.f32.gmra.mrb[0].mxu0 %v1027
    %v1135 = vpop.f32.mrb[0].mxu0
    %v1136 = vadd.f32 %v1032, %v1135
    %v1137 = vpop.f32.mrb[0].mxu0
    %1138 = vdwg.mxu0
    %vm1139 = vcmp.gt.f32.partialorder %v1101, 0.0
    %vm1140 = vcmp.gt.f32.partialorder %v1106, 0.0
    %vm1141 = vcmp.gt.f32.partialorder %v1111, 0.0
    %vm1142 = vcmp.gt.f32.partialorder %v1116, 0.0
    %vm1143 = vcmp.gt.f32.partialorder %v1121, 0.0
    %vm1144 = vcmp.gt.f32.partialorder %v1126, 0.0
    %vm1145 = vcmp.gt.f32.partialorder %v1131, 0.0
    %vm1146 = vcmp.gt.f32.partialorder %v1136, 0.0
    %v1147 = vmul.f32 %v1101, 0.01
    %v1148 = vmul.f32 %v1106, 0.01
    %v1149 = vmul.f32 %v1111, 0.01
    %v1150 = vmul.f32 %v1116, 0.01
    %v1151 = vmul.f32 %v1121, 0.01
    %v1152 = vmul.f32 %v1126, 0.01
    %v1153 = vmul.f32 %v1131, 0.01
    %v1154 = vmul.f32 %v1136, 0.01
    %v1155 = vsel %vm1139, %v1101, %v1147
    %v1156 = vsel %vm1140, %v1106, %v1148
    %v1157 = vsel %vm1141, %v1111, %v1149
    %v1158 = vsel %vm1142, %v1116, %v1150
    %v1159 = vsel %vm1143, %v1121, %v1151
    %v1160 = vsel %vm1144, %v1126, %v1152
    %v1161 = vsel %vm1145, %v1131, %v1153
    %v1162 = vsel %vm1146, %v1136, %v1154
    %v1164 = vlaneseq
    %v1165 = vshrl.u32 %v1164, 7
    %v1166 = vsub.s32 0, %v1165
    %v1167 = vrot.slane %v209, %v1166
    %1169 = vmatprep.subr.mxu0 0.0
    %1170 = vmatpush1.msra.mxu0 %v193
    %1171 = vmatprep.subr.mxu0 0.0
    %1172 = vmatpush1.msra.mxu0 %v194
    %1173 = vmatprep.subr.mxu0 0.0
    %1174 = vmatpush1.msra.mxu0 %v195
    %1175 = vmatprep.subr.mxu0 0.0
    %1176 = vmatpush1.msra.mxu0 %v196
    %1177 = vmatprep.subr.mxu0 0.0
    %1178 = vmatpush1.msra.mxu0 %v197
    %1179 = vmatprep.subr.mxu0 0.0
    %1180 = vmatpush1.msra.mxu0 %v198
    %1181 = vmatprep.subr.mxu0 0.0
    %1182 = vmatpush1.msra.mxu0 %v199
    %1183 = vmatprep.subr.mxu0 0.0
    %1184 = vmatpush1.msra.mxu0 %v200
    %1185 = vmatprep.subr.mxu0 0.0
    %1186 = vmatpush1.msra.mxu0 %v201
    %1187 = vmatprep.subr.mxu0 0.0
    %1188 = vmatpush1.msra.mxu0 %v202
    %1189 = vmatprep.subr.mxu0 0.0
    %1190 = vmatpush1.msra.mxu0 %v203
    %1191 = vmatprep.subr.mxu0 0.0
    %1192 = vmatpush1.msra.mxu0 %v204
    %1193 = vmatprep.subr.mxu0 0.0
    %1194 = vmatpush1.msra.mxu0 %v205
    %1195 = vmatprep.subr.mxu0 0.0
    %1196 = vmatpush1.msra.mxu0 %v206
    %1197 = vmatprep.subr.mxu0 0.0
    %1198 = vmatpush1.msra.mxu0 %v207
    %1199 = vmatprep.subr.mxu0 0.0
    %1200 = vmatpush1.msra.mxu0 %v208
    %1201 = vmatprep.subr.mxu0 0.0
    %1202 = vmatpush1.msra.mxu0 0.0
    %1203 = vmatprep.subr.mxu0 0.0
    %1204 = vmatpush1.msra.mxu0 0.0
    %1205 = vmatprep.subr.mxu0 0.0
    %1206 = vmatpush1.msra.mxu0 0.0
    %1207 = vmatprep.subr.mxu0 0.0
    %1208 = vmatpush1.msra.mxu0 0.0
    %1209 = vmatprep.subr.mxu0 0.0
    %1210 = vmatpush1.msra.mxu0 0.0
    %1211 = vmatprep.subr.mxu0 0.0
    %1212 = vmatpush1.msra.mxu0 0.0
    %1213 = vmatprep.subr.mxu0 0.0
    %1214 = vmatpush1.msra.mxu0 0.0
    %1215 = vmatprep.subr.mxu0 0.0
    %1216 = vmatpush1.msra.mxu0 0.0
    %1217 = vmatprep.subr.mxu0 0.0
    %1218 = vmatpush1.msra.mxu0 0.0
    %1219 = vmatprep.subr.mxu0 0.0
    %1220 = vmatpush1.msra.mxu0 0.0
    %1221 = vmatprep.subr.mxu0 0.0
    %1222 = vmatpush1.msra.mxu0 0.0
    %1223 = vmatprep.subr.mxu0 0.0
    %1224 = vmatpush1.msra.mxu0 0.0
    %1225 = vmatprep.subr.mxu0 0.0
    %1226 = vmatpush1.msra.mxu0 0.0
    %1227 = vmatprep.subr.mxu0 0.0
    %1228 = vmatpush1.msra.mxu0 0.0
    %1229 = vmatprep.subr.mxu0 0.0
    %1230 = vmatpush1.msra.mxu0 0.0
    %1231 = vmatprep.subr.mxu0 0.0
    %1232 = vmatpush1.msra.mxu0 0.0
    %1233 = vmatprep.mubr.f32.mxu0 0.0
    %1234 = vmatmul.mubr.f32.gmra.mrb[0].mxu0 %v1155
    %v1235 = vpop.f32.mrb[0].mxu0
    %v1236 = vadd.f32 %v1167, %v1235
    %v1237 = vpop.f32.mrb[0].mxu0
    %1238 = vmatprep.mubr.f32.mxu0 0.0
    %1239 = vmatmul.mubr.f32.gmra.mrb[0].mxu0 %v1156
    %v1240 = vpop.f32.mrb[0].mxu0
    %v1241 = vadd.f32 %v1167, %v1240
    %v1242 = vpop.f32.mrb[0].mxu0
    %1243 = vmatprep.mubr.f32.mxu0 0.0
    %1244 = vmatmul.mubr.f32.gmra.mrb[0].mxu0 %v1157
    %v1245 = vpop.f32.mrb[0].mxu0
    %v1246 = vadd.f32 %v1167, %v1245
    %v1247 = vpop.f32.mrb[0].mxu0
    %1248 = vmatprep.mubr.f32.mxu0 0.0
    %1249 = vmatmul.mubr.f32.gmra.mrb[0].mxu0 %v1158
    %v1250 = vpop.f32.mrb[0].mxu0
    %v1251 = vadd.f32 %v1167, %v1250
    %v1252 = vpop.f32.mrb[0].mxu0
    %1253 = vmatprep.mubr.f32.mxu0 0.0
    %1254 = vmatmul.mubr.f32.gmra.mrb[0].mxu0 %v1159
    %v1255 = vpop.f32.mrb[0].mxu0
    %v1256 = vadd.f32 %v1167, %v1255
    %v1257 = vpop.f32.mrb[0].mxu0
    %1258 = vmatprep.mubr.f32.mxu0 0.0
    %1259 = vmatmul.mubr.f32.gmra.mrb[0].mxu0 %v1160
    %v1260 = vpop.f32.mrb[0].mxu0
    %v1261 = vadd.f32 %v1167, %v1260
    %v1262 = vpop.f32.mrb[0].mxu0
    %1263 = vmatprep.mubr.f32.mxu0 0.0
    %1264 = vmatmul.mubr.f32.gmra.mrb[0].mxu0 %v1161
    %v1265 = vpop.f32.mrb[0].mxu0
    %v1266 = vadd.f32 %v1167, %v1265
    %v1267 = vpop.f32.mrb[0].mxu0
    %1268 = vmatprep.mubr.f32.mxu0 0.0
    %1269 = vmatmul.mubr.f32.gmra.mrb[0].mxu0 %v1162
    %v1270 = vpop.f32.mrb[0].mxu0
    %v1271 = vadd.f32 %v1167, %v1270
    %v1272 = vpop.f32.mrb[0].mxu0
    %1273 = vdwg.mxu0
    %1274 = vmatprep.subr.mxu0 0.0
    %1275 = vmatpush1.msra.mxu0 %v226
    %1276 = vmatprep.subr.mxu0 0.0
    %1277 = vmatpush1.msra.mxu0 %v227
    %1278 = vmatprep.subr.mxu0 0.0
    %1279 = vmatpush1.msra.mxu0 %v228
    %1280 = vmatprep.subr.mxu0 0.0
    %1281 = vmatpush1.msra.mxu0 %v229
    %1282 = vmatprep.subr.mxu0 0.0
    %1283 = vmatpush1.msra.mxu0 %v230
    %1284 = vmatprep.subr.mxu0 0.0
    %1285 = vmatpush1.msra.mxu0 %v231
    %1286 = vmatprep.subr.mxu0 0.0
    %1287 = vmatpush1.msra.mxu0 %v232
    %1288 = vmatprep.subr.mxu0 0.0
    %1289 = vmatpush1.msra.mxu0 %v233
    %1290 = vmatprep.subr.mxu0 0.0
    %1291 = vmatpush1.msra.mxu0 %v234
    %1292 = vmatprep.subr.mxu0 0.0
    %1293 = vmatpush1.msra.mxu0 %v235
    %1294 = vmatprep.subr.mxu0 0.0
    %1295 = vmatpush1.msra.mxu0 %v236
    %1296 = vmatprep.subr.mxu0 0.0
    %1297 = vmatpush1.msra.mxu0 %v237
    %1298 = vmatprep.subr.mxu0 0.0
    %1299 = vmatpush1.msra.mxu0 %v238
    %1300 = vmatprep.subr.mxu0 0.0
    %1301 = vmatpush1.msra.mxu0 %v239
    %1302 = vmatprep.subr.mxu0 0.0
    %1303 = vmatpush1.msra.mxu0 %v240
    %1304 = vmatprep.subr.mxu0 0.0
    %1305 = vmatpush1.msra.mxu0 %v241
    %1306 = vmatprep.subr.mxu0 0.0
    %1307 = vmatpush1.msra.mxu0 0.0
    %1308 = vmatprep.subr.mxu0 0.0
    %1309 = vmatpush1.msra.mxu0 0.0
    %1310 = vmatprep.subr.mxu0 0.0
    %1311 = vmatpush1.msra.mxu0 0.0
    %1312 = vmatprep.subr.mxu0 0.0
    %1313 = vmatpush1.msra.mxu0 0.0
    %1314 = vmatprep.subr.mxu0 0.0
    %1315 = vmatpush1.msra.mxu0 0.0
    %1316 = vmatprep.subr.mxu0 0.0
    %1317 = vmatpush1.msra.mxu0 0.0
    %1318 = vmatprep.subr.mxu0 0.0
    %1319 = vmatpush1.msra.mxu0 0.0
    %1320 = vmatprep.subr.mxu0 0.0
    %1321 = vmatpush1.msra.mxu0 0.0
    %1322 = vmatprep.subr.mxu0 0.0
    %1323 = vmatpush1.msra.mxu0 0.0
    %1324 = vmatprep.subr.mxu0 0.0
    %1325 = vmatpush1.msra.mxu0 0.0
    %1326 = vmatprep.subr.mxu0 0.0
    %1327 = vmatpush1.msra.mxu0 0.0
    %1328 = vmatprep.subr.mxu0 0.0
    %1329 = vmatpush1.msra.mxu0 0.0
    %1330 = vmatprep.subr.mxu0 0.0
    %1331 = vmatpush1.msra.mxu0 0.0
    %1332 = vmatprep.subr.mxu0 0.0
    %1333 = vmatpush1.msra.mxu0 0.0
    %1334 = vmatprep.subr.mxu0 0.0
    %1335 = vmatpush1.msra.mxu0 0.0
    %1336 = vmatprep.subr.mxu0 0.0
    %1337 = vmatpush1.msra.mxu0 0.0
    %1338 = vmatprep.mubr.f32.mxu0 0.0
    %1339 = vmatmul.mubr.f32.gmra.mrb[0].mxu0 %v853
    %v1340 = vpop.f32.mrb[0].mxu0
    %v1341 = vadd.f32 0.0, %v1340
    %v1342 = vpop.f32.mrb[0].mxu0
    %1343 = vmatprep.mubr.f32.mxu0 0.0
    %1344 = vmatmul.mubr.f32.gmra.mrb[0].mxu0 %v858
    %v1345 = vpop.f32.mrb[0].mxu0
    %v1346 = vadd.f32 0.0, %v1345
    %v1347 = vpop.f32.mrb[0].mxu0
    %1348 = vmatprep.mubr.f32.mxu0 0.0
    %1349 = vmatmul.mubr.f32.gmra.mrb[0].mxu0 %v863
    %v1350 = vpop.f32.mrb[0].mxu0
    %v1351 = vadd.f32 0.0, %v1350
    %v1352 = vpop.f32.mrb[0].mxu0
    %1353 = vmatprep.mubr.f32.mxu0 0.0
    %1354 = vmatmul.mubr.f32.gmra.mrb[0].mxu0 %v868
    %v1355 = vpop.f32.mrb[0].mxu0
    %v1356 = vadd.f32 0.0, %v1355
    %v1357 = vpop.f32.mrb[0].mxu0
    %1358 = vmatprep.mubr.f32.mxu0 0.0
    %1359 = vmatmul.mubr.f32.gmra.mrb[0].mxu0 %v873
    %v1360 = vpop.f32.mrb[0].mxu0
    %v1361 = vadd.f32 0.0, %v1360
    %v1362 = vpop.f32.mrb[0].mxu0
    %1363 = vmatprep.mubr.f32.mxu0 0.0
    %1364 = vmatmul.mubr.f32.gmra.mrb[0].mxu0 %v878
    %v1365 = vpop.f32.mrb[0].mxu0
    %v1366 = vadd.f32 0.0, %v1365
    %v1367 = vpop.f32.mrb[0].mxu0
    %1368 = vmatprep.mubr.f32.mxu0 0.0
    %1369 = vmatmul.mubr.f32.gmra.mrb[0].mxu0 %v883
    %v1370 = vpop.f32.mrb[0].mxu0
    %v1371 = vadd.f32 0.0, %v1370
    %v1372 = vpop.f32.mrb[0].mxu0
    %1373 = vmatprep.mubr.f32.mxu0 0.0
    %1374 = vmatmul.mubr.f32.gmra.mrb[0].mxu0 %v888
    %v1375 = vpop.f32.mrb[0].mxu0
    %v1376 = vadd.f32 0.0, %v1375
    %v1377 = vpop.f32.mrb[0].mxu0
    %1378 = vdwg.mxu0
    %1379 = vmatprep.subr.mxu0 0.0
    %1380 = vmatpush1.msra.mxu0 %v210
    %1381 = vmatprep.subr.mxu0 0.0
    %1382 = vmatpush1.msra.mxu0 %v211
    %1383 = vmatprep.subr.mxu0 0.0
    %1384 = vmatpush1.msra.mxu0 %v212
    %1385 = vmatprep.subr.mxu0 0.0
    %1386 = vmatpush1.msra.mxu0 %v213
    %1387 = vmatprep.subr.mxu0 0.0
    %1388 = vmatpush1.msra.mxu0 %v214
    %1389 = vmatprep.subr.mxu0 0.0
    %1390 = vmatpush1.msra.mxu0 %v215
    %1391 = vmatprep.subr.mxu0 0.0
    %1392 = vmatpush1.msra.mxu0 %v216
    %1393 = vmatprep.subr.mxu0 0.0
    %1394 = vmatpush1.msra.mxu0 %v217
    %1395 = vmatprep.subr.mxu0 0.0
    %1396 = vmatpush1.msra.mxu0 %v218
    %1397 = vmatprep.subr.mxu0 0.0
    %1398 = vmatpush1.msra.mxu0 %v219
    %1399 = vmatprep.subr.mxu0 0.0
    %1400 = vmatpush1.msra.mxu0 %v220
    %1401 = vmatprep.subr.mxu0 0.0
    %1402 = vmatpush1.msra.mxu0 %v221
    %1403 = vmatprep.subr.mxu0 0.0
    %1404 = vmatpush1.msra.mxu0 %v222
    %1405 = vmatprep.subr.mxu0 0.0
    %1406 = vmatpush1.msra.mxu0 %v223
    %1407 = vmatprep.subr.mxu0 0.0
    %1408 = vmatpush1.msra.mxu0 %v224
    %1409 = vmatprep.subr.mxu0 0.0
    %1410 = vmatpush1.msra.mxu0 %v225
    %1411 = vmatprep.subr.mxu0 0.0
    %1412 = vmatpush1.msra.mxu0 0.0
    %1413 = vmatprep.subr.mxu0 0.0
    %1414 = vmatpush1.msra.mxu0 0.0
    %1415 = vmatprep.subr.mxu0 0.0
    %1416 = vmatpush1.msra.mxu0 0.0
    %1417 = vmatprep.subr.mxu0 0.0
    %1418 = vmatpush1.msra.mxu0 0.0
    %1419 = vmatprep.subr.mxu0 0.0
    %1420 = vmatpush1.msra.mxu0 0.0
    %1421 = vmatprep.subr.mxu0 0.0
    %1422 = vmatpush1.msra.mxu0 0.0
    %1423 = vmatprep.subr.mxu0 0.0
    %1424 = vmatpush1.msra.mxu0 0.0
    %1425 = vmatprep.subr.mxu0 0.0
    %1426 = vmatpush1.msra.mxu0 0.0
    %1427 = vmatprep.subr.mxu0 0.0
    %1428 = vmatpush1.msra.mxu0 0.0
    %1429 = vmatprep.subr.mxu0 0.0
    %1430 = vmatpush1.msra.mxu0 0.0
    %1431 = vmatprep.subr.mxu0 0.0
    %1432 = vmatpush1.msra.mxu0 0.0
    %1433 = vmatprep.subr.mxu0 0.0
    %1434 = vmatpush1.msra.mxu0 0.0
    %1435 = vmatprep.subr.mxu0 0.0
    %1436 = vmatpush1.msra.mxu0 0.0
    %1437 = vmatprep.subr.mxu0 0.0
    %1438 = vmatpush1.msra.mxu0 0.0
    %1439 = vmatprep.subr.mxu0 0.0
    %1440 = vmatpush1.msra.mxu0 0.0
    %1441 = vmatprep.subr.mxu0 0.0
    %1442 = vmatpush1.msra.mxu0 0.0
    %1443 = vmatprep.mubr.f32.mxu0 0.0
    %1444 = vmatmul.mubr.f32.gmra.mrb[0].mxu0 %v813
    %v1445 = vpop.f32.mrb[0].mxu0
    %v1446 = vadd.f32 %v1341, %v1445
    %v1447 = vpop.f32.mrb[0].mxu0
    %1448 = vmatprep.mubr.f32.mxu0 0.0
    %1449 = vmatmul.mubr.f32.gmra.mrb[0].mxu0 %v818
    %v1450 = vpop.f32.mrb[0].mxu0
    %v1451 = vadd.f32 %v1346, %v1450
    %v1452 = vpop.f32.mrb[0].mxu0
    %1453 = vmatprep.mubr.f32.mxu0 0.0
    %1454 = vmatmul.mubr.f32.gmra.mrb[0].mxu0 %v823
    %v1455 = vpop.f32.mrb[0].mxu0
    %v1456 = vadd.f32 %v1351, %v1455
    %v1457 = vpop.f32.mrb[0].mxu0
    %1458 = vmatprep.mubr.f32.mxu0 0.0
    %1459 = vmatmul.mubr.f32.gmra.mrb[0].mxu0 %v828
    %v1460 = vpop.f32.mrb[0].mxu0
    %v1461 = vadd.f32 %v1356, %v1460
    %v1462 = vpop.f32.mrb[0].mxu0
    %1463 = vmatprep.mubr.f32.mxu0 0.0
    %1464 = vmatmul.mubr.f32.gmra.mrb[0].mxu0 %v833
    %v1465 = vpop.f32.mrb[0].mxu0
    %v1466 = vadd.f32 %v1361, %v1465
    %v1467 = vpop.f32.mrb[0].mxu0
    %1468 = vmatprep.mubr.f32.mxu0 0.0
    %1469 = vmatmul.mubr.f32.gmra.mrb[0].mxu0 %v838
    %v1470 = vpop.f32.mrb[0].mxu0
    %v1471 = vadd.f32 %v1366, %v1470
    %v1472 = vpop.f32.mrb[0].mxu0
    %1473 = vmatprep.mubr.f32.mxu0 0.0
    %1474 = vmatmul.mubr.f32.gmra.mrb[0].mxu0 %v843
    %v1475 = vpop.f32.mrb[0].mxu0
    %v1476 = vadd.f32 %v1371, %v1475
    %v1477 = vpop.f32.mrb[0].mxu0
    %1478 = vmatprep.mubr.f32.mxu0 0.0
    %1479 = vmatmul.mubr.f32.gmra.mrb[0].mxu0 %v848
    %v1480 = vpop.f32.mrb[0].mxu0
    %v1481 = vadd.f32 %v1376, %v1480
    %v1482 = vpop.f32.mrb[0].mxu0
    %1483 = vdwg.mxu0
    %v1485 = vlaneseq
    %v1486 = vshrl.u32 %v1485, 7
    %v1487 = vsub.s32 0, %v1486
    %v1488 = vrot.slane %v242, %v1487
    %v1490 = vadd.f32 %v1446, %v1488
    %v1491 = vadd.f32 %v1451, %v1488
    %v1492 = vadd.f32 %v1456, %v1488
    %v1493 = vadd.f32 %v1461, %v1488
    %v1494 = vadd.f32 %v1466, %v1488
    %v1495 = vadd.f32 %v1471, %v1488
    %v1496 = vadd.f32 %v1476, %v1488
    %v1497 = vadd.f32 %v1481, %v1488
    %vm1498 = vcmp.gt.f32.partialorder %v1490, 0.0
    %vm1499 = vcmp.gt.f32.partialorder %v1491, 0.0
    %vm1500 = vcmp.gt.f32.partialorder %v1492, 0.0
    %vm1501 = vcmp.gt.f32.partialorder %v1493, 0.0
    %vm1502 = vcmp.gt.f32.partialorder %v1494, 0.0
    %vm1503 = vcmp.gt.f32.partialorder %v1495, 0.0
    %vm1504 = vcmp.gt.f32.partialorder %v1496, 0.0
    %vm1505 = vcmp.gt.f32.partialorder %v1497, 0.0
    %v1506 = vmul.f32 %v1490, 0.01
    %v1507 = vmul.f32 %v1491, 0.01
    %v1508 = vmul.f32 %v1492, 0.01
    %v1509 = vmul.f32 %v1493, 0.01
    %v1510 = vmul.f32 %v1494, 0.01
    %v1511 = vmul.f32 %v1495, 0.01
    %v1512 = vmul.f32 %v1496, 0.01
    %v1513 = vmul.f32 %v1497, 0.01
    %v1514 = vsel %vm1498, %v1490, %v1506
    %v1515 = vsel %vm1499, %v1491, %v1507
    %v1516 = vsel %vm1500, %v1492, %v1508
    %v1517 = vsel %vm1501, %v1493, %v1509
    %v1518 = vsel %vm1502, %v1494, %v1510
    %v1519 = vsel %vm1503, %v1495, %v1511
    %v1520 = vsel %vm1504, %v1496, %v1512
    %v1521 = vsel %vm1505, %v1497, %v1513
    %v1523 = vlaneseq
    %v1524 = vshrl.u32 %v1523, 7
    %v1525 = vsub.s32 0, %v1524
    %v1526 = vrot.slane %v259, %v1525
    %1528 = vmatprep.subr.mxu0 0.0
    %1529 = vmatpush1.msra.mxu0 %v243
    %1530 = vmatprep.subr.mxu0 0.0
    %1531 = vmatpush1.msra.mxu0 %v244
    %1532 = vmatprep.subr.mxu0 0.0
    %1533 = vmatpush1.msra.mxu0 %v245
    %1534 = vmatprep.subr.mxu0 0.0
    %1535 = vmatpush1.msra.mxu0 %v246
    %1536 = vmatprep.subr.mxu0 0.0
    %1537 = vmatpush1.msra.mxu0 %v247
    %1538 = vmatprep.subr.mxu0 0.0
    %1539 = vmatpush1.msra.mxu0 %v248
    %1540 = vmatprep.subr.mxu0 0.0
    %1541 = vmatpush1.msra.mxu0 %v249
    %1542 = vmatprep.subr.mxu0 0.0
    %1543 = vmatpush1.msra.mxu0 %v250
    %1544 = vmatprep.subr.mxu0 0.0
    %1545 = vmatpush1.msra.mxu0 %v251
    %1546 = vmatprep.subr.mxu0 0.0
    %1547 = vmatpush1.msra.mxu0 %v252
    %1548 = vmatprep.subr.mxu0 0.0
    %1549 = vmatpush1.msra.mxu0 %v253
    %1550 = vmatprep.subr.mxu0 0.0
    %1551 = vmatpush1.msra.mxu0 %v254
    %1552 = vmatprep.subr.mxu0 0.0
    %1553 = vmatpush1.msra.mxu0 %v255
    %1554 = vmatprep.subr.mxu0 0.0
    %1555 = vmatpush1.msra.mxu0 %v256
    %1556 = vmatprep.subr.mxu0 0.0
    %1557 = vmatpush1.msra.mxu0 %v257
    %1558 = vmatprep.subr.mxu0 0.0
    %1559 = vmatpush1.msra.mxu0 %v258
    %1560 = vmatprep.subr.mxu0 0.0
    %1561 = vmatpush1.msra.mxu0 0.0
    %1562 = vmatprep.subr.mxu0 0.0
    %1563 = vmatpush1.msra.mxu0 0.0
    %1564 = vmatprep.subr.mxu0 0.0
    %1565 = vmatpush1.msra.mxu0 0.0
    %1566 = vmatprep.subr.mxu0 0.0
    %1567 = vmatpush1.msra.mxu0 0.0
    %1568 = vmatprep.subr.mxu0 0.0
    %1569 = vmatpush1.msra.mxu0 0.0
    %1570 = vmatprep.subr.mxu0 0.0
    %1571 = vmatpush1.msra.mxu0 0.0
    %1572 = vmatprep.subr.mxu0 0.0
    %1573 = vmatpush1.msra.mxu0 0.0
    %1574 = vmatprep.subr.mxu0 0.0
    %1575 = vmatpush1.msra.mxu0 0.0
    %1576 = vmatprep.subr.mxu0 0.0
    %1577 = vmatpush1.msra.mxu0 0.0
    %1578 = vmatprep.subr.mxu0 0.0
    %1579 = vmatpush1.msra.mxu0 0.0
    %1580 = vmatprep.subr.mxu0 0.0
    %1581 = vmatpush1.msra.mxu0 0.0
    %1582 = vmatprep.subr.mxu0 0.0
    %1583 = vmatpush1.msra.mxu0 0.0
    %1584 = vmatprep.subr.mxu0 0.0
    %1585 = vmatpush1.msra.mxu0 0.0
    %1586 = vmatprep.subr.mxu0 0.0
    %1587 = vmatpush1.msra.mxu0 0.0
    %1588 = vmatprep.subr.mxu0 0.0
    %1589 = vmatpush1.msra.mxu0 0.0
    %1590 = vmatprep.subr.mxu0 0.0
    %1591 = vmatpush1.msra.mxu0 0.0
    %1592 = vmatprep.mubr.f32.mxu0 0.0
    %1593 = vmatmul.mubr.f32.gmra.mrb[0].mxu0 %v1514
    %v1594 = vpop.f32.mrb[0].mxu0
    %v1595 = vadd.f32 %v1526, %v1594
    %v1596 = vpop.f32.mrb[0].mxu0
    %1597 = vmatprep.mubr.f32.mxu0 0.0
    %1598 = vmatmul.mubr.f32.gmra.mrb[0].mxu0 %v1515
    %v1599 = vpop.f32.mrb[0].mxu0
    %v1600 = vadd.f32 %v1526, %v1599
    %v1601 = vpop.f32.mrb[0].mxu0
    %1602 = vmatprep.mubr.f32.mxu0 0.0
    %1603 = vmatmul.mubr.f32.gmra.mrb[0].mxu0 %v1516
    %v1604 = vpop.f32.mrb[0].mxu0
    %v1605 = vadd.f32 %v1526, %v1604
    %v1606 = vpop.f32.mrb[0].mxu0
    %1607 = vmatprep.mubr.f32.mxu0 0.0
    %1608 = vmatmul.mubr.f32.gmra.mrb[0].mxu0 %v1517
    %v1609 = vpop.f32.mrb[0].mxu0
    %v1610 = vadd.f32 %v1526, %v1609
    %v1611 = vpop.f32.mrb[0].mxu0
    %1612 = vmatprep.mubr.f32.mxu0 0.0
    %1613 = vmatmul.mubr.f32.gmra.mrb[0].mxu0 %v1518
    %v1614 = vpop.f32.mrb[0].mxu0
    %v1615 = vadd.f32 %v1526, %v1614
    %v1616 = vpop.f32.mrb[0].mxu0
    %1617 = vmatprep.mubr.f32.mxu0 0.0
    %1618 = vmatmul.mubr.f32.gmra.mrb[0].mxu0 %v1519
    %v1619 = vpop.f32.mrb[0].mxu0
    %v1620 = vadd.f32 %v1526, %v1619
    %v1621 = vpop.f32.mrb[0].mxu0
    %1622 = vmatprep.mubr.f32.mxu0 0.0
    %1623 = vmatmul.mubr.f32.gmra.mrb[0].mxu0 %v1520
    %v1624 = vpop.f32.mrb[0].mxu0
    %v1625 = vadd.f32 %v1526, %v1624
    %v1626 = vpop.f32.mrb[0].mxu0
    %1627 = vmatprep.mubr.f32.mxu0 0.0
    %1628 = vmatmul.mubr.f32.gmra.mrb[0].mxu0 %v1521
    %v1629 = vpop.f32.mrb[0].mxu0
    %v1630 = vadd.f32 %v1526, %v1629
    %v1631 = vpop.f32.mrb[0].mxu0
    %1632 = vdwg.mxu0
    %vm1633 = vcmp.gt.f32.partialorder %v1595, 0.0
    %vm1634 = vcmp.gt.f32.partialorder %v1600, 0.0
    %vm1635 = vcmp.gt.f32.partialorder %v1605, 0.0
    %vm1636 = vcmp.gt.f32.partialorder %v1610, 0.0
    %vm1637 = vcmp.gt.f32.partialorder %v1615, 0.0
    %vm1638 = vcmp.gt.f32.partialorder %v1620, 0.0
    %vm1639 = vcmp.gt.f32.partialorder %v1625, 0.0
    %vm1640 = vcmp.gt.f32.partialorder %v1630, 0.0
    %v1641 = vmul.f32 %v1595, 0.01
    %v1642 = vmul.f32 %v1600, 0.01
    %v1643 = vmul.f32 %v1605, 0.01
    %v1644 = vmul.f32 %v1610, 0.01
    %v1645 = vmul.f32 %v1615, 0.01
    %v1646 = vmul.f32 %v1620, 0.01
    %v1647 = vmul.f32 %v1625, 0.01
    %v1648 = vmul.f32 %v1630, 0.01
    %v1649 = vsel %vm1633, %v1595, %v1641
    %v1650 = vsel %vm1634, %v1600, %v1642
    %v1651 = vsel %vm1635, %v1605, %v1643
    %v1652 = vsel %vm1636, %v1610, %v1644
    %v1653 = vsel %vm1637, %v1615, %v1645
    %v1654 = vsel %vm1638, %v1620, %v1646
    %v1655 = vsel %vm1639, %v1625, %v1647
    %v1656 = vsel %vm1640, %v1630, %v1648
    %v1658 = vlaneseq
    %v1659 = vshrl.u32 %v1658, 7
    %v1660 = vsub.s32 0, %v1659
    %v1661 = vrot.slane %v276, %v1660
    %1663 = vmatprep.subr.mxu0 0.0
    %1664 = vmatpush1.msra.mxu0 %v260
    %1665 = vmatprep.subr.mxu0 0.0
    %1666 = vmatpush1.msra.mxu0 %v261
    %1667 = vmatprep.subr.mxu0 0.0
    %1668 = vmatpush1.msra.mxu0 %v262
    %1669 = vmatprep.subr.mxu0 0.0
    %1670 = vmatpush1.msra.mxu0 %v263
    %1671 = vmatprep.subr.mxu0 0.0
    %1672 = vmatpush1.msra.mxu0 %v264
    %1673 = vmatprep.subr.mxu0 0.0
    %1674 = vmatpush1.msra.mxu0 %v265
    %1675 = vmatprep.subr.mxu0 0.0
    %1676 = vmatpush1.msra.mxu0 %v266
    %1677 = vmatprep.subr.mxu0 0.0
    %1678 = vmatpush1.msra.mxu0 %v267
    %1679 = vmatprep.subr.mxu0 0.0
    %1680 = vmatpush1.msra.mxu0 %v268
    %1681 = vmatprep.subr.mxu0 0.0
    %1682 = vmatpush1.msra.mxu0 %v269
    %1683 = vmatprep.subr.mxu0 0.0
    %1684 = vmatpush1.msra.mxu0 %v270
    %1685 = vmatprep.subr.mxu0 0.0
    %1686 = vmatpush1.msra.mxu0 %v271
    %1687 = vmatprep.subr.mxu0 0.0
    %1688 = vmatpush1.msra.mxu0 %v272
    %1689 = vmatprep.subr.mxu0 0.0
    %1690 = vmatpush1.msra.mxu0 %v273
    %1691 = vmatprep.subr.mxu0 0.0
    %1692 = vmatpush1.msra.mxu0 %v274
    %1693 = vmatprep.subr.mxu0 0.0
    %1694 = vmatpush1.msra.mxu0 %v275
    %1695 = vmatprep.subr.mxu0 0.0
    %1696 = vmatpush1.msra.mxu0 0.0
    %1697 = vmatprep.subr.mxu0 0.0
    %1698 = vmatpush1.msra.mxu0 0.0
    %1699 = vmatprep.subr.mxu0 0.0
    %1700 = vmatpush1.msra.mxu0 0.0
    %1701 = vmatprep.subr.mxu0 0.0
    %1702 = vmatpush1.msra.mxu0 0.0
    %1703 = vmatprep.subr.mxu0 0.0
    %1704 = vmatpush1.msra.mxu0 0.0
    %1705 = vmatprep.subr.mxu0 0.0
    %1706 = vmatpush1.msra.mxu0 0.0
    %1707 = vmatprep.subr.mxu0 0.0
    %1708 = vmatpush1.msra.mxu0 0.0
    %1709 = vmatprep.subr.mxu0 0.0
    %1710 = vmatpush1.msra.mxu0 0.0
    %1711 = vmatprep.subr.mxu0 0.0
    %1712 = vmatpush1.msra.mxu0 0.0
    %1713 = vmatprep.subr.mxu0 0.0
    %1714 = vmatpush1.msra.mxu0 0.0
    %1715 = vmatprep.subr.mxu0 0.0
    %1716 = vmatpush1.msra.mxu0 0.0
    %1717 = vmatprep.subr.mxu0 0.0
    %1718 = vmatpush1.msra.mxu0 0.0
    %1719 = vmatprep.subr.mxu0 0.0
    %1720 = vmatpush1.msra.mxu0 0.0
    %1721 = vmatprep.subr.mxu0 0.0
    %1722 = vmatpush1.msra.mxu0 0.0
    %1723 = vmatprep.subr.mxu0 0.0
    %1724 = vmatpush1.msra.mxu0 0.0
    %1725 = vmatprep.subr.mxu0 0.0
    %1726 = vmatpush1.msra.mxu0 0.0
    %1727 = vmatprep.mubr.f32.mxu0 0.0
    %1728 = vmatmul.mubr.f32.gmra.mrb[0].mxu0 %v1649
    %v1729 = vpop.f32.mrb[0].mxu0
    %v1730 = vadd.f32 %v1661, %v1729
    %v1731 = vpop.f32.mrb[0].mxu0
    %1732 = vmatprep.mubr.f32.mxu0 0.0
    %1733 = vmatmul.mubr.f32.gmra.mrb[0].mxu0 %v1650
    %v1734 = vpop.f32.mrb[0].mxu0
    %v1735 = vadd.f32 %v1661, %v1734
    %v1736 = vpop.f32.mrb[0].mxu0
    %1737 = vmatprep.mubr.f32.mxu0 0.0
    %1738 = vmatmul.mubr.f32.gmra.mrb[0].mxu0 %v1651
    %v1739 = vpop.f32.mrb[0].mxu0
    %v1740 = vadd.f32 %v1661, %v1739
    %v1741 = vpop.f32.mrb[0].mxu0
    %1742 = vmatprep.mubr.f32.mxu0 0.0
    %1743 = vmatmul.mubr.f32.gmra.mrb[0].mxu0 %v1652
    %v1744 = vpop.f32.mrb[0].mxu0
    %v1745 = vadd.f32 %v1661, %v1744
    %v1746 = vpop.f32.mrb[0].mxu0
    %1747 = vmatprep.mubr.f32.mxu0 0.0
    %1748 = vmatmul.mubr.f32.gmra.mrb[0].mxu0 %v1653
    %v1749 = vpop.f32.mrb[0].mxu0
    %v1750 = vadd.f32 %v1661, %v1749
    %v1751 = vpop.f32.mrb[0].mxu0
    %1752 = vmatprep.mubr.f32.mxu0 0.0
    %1753 = vmatmul.mubr.f32.gmra.mrb[0].mxu0 %v1654
    %v1754 = vpop.f32.mrb[0].mxu0
    %v1755 = vadd.f32 %v1661, %v1754
    %v1756 = vpop.f32.mrb[0].mxu0
    %1757 = vmatprep.mubr.f32.mxu0 0.0
    %1758 = vmatmul.mubr.f32.gmra.mrb[0].mxu0 %v1655
    %v1759 = vpop.f32.mrb[0].mxu0
    %v1760 = vadd.f32 %v1661, %v1759
    %v1761 = vpop.f32.mrb[0].mxu0
    %1762 = vmatprep.mubr.f32.mxu0 0.0
    %1763 = vmatmul.mubr.f32.gmra.mrb[0].mxu0 %v1656
    %v1764 = vpop.f32.mrb[0].mxu0
    %v1765 = vadd.f32 %v1661, %v1764
    %v1766 = vpop.f32.mrb[0].mxu0
    %1767 = vdwg.mxu0
    %1768 = vst [vmem:[%s21] sm:$0xff] %v853
    %1769 = vst [vmem:[%s21 + $0x18] sm:$0xff] %v858
    %1770 = vst [vmem:[%s21 + $0x30] sm:$0xff] %v863
    %1771 = vst [vmem:[%s21 + $0x48] sm:$0xff] %v868
    %1772 = vst [vmem:[%s21 + $0x60] sm:$0xff] %v873
    %1773 = vst [vmem:[%s21 + $0x78] sm:$0xff] %v878
    %1774 = vst [vmem:[%s21 + $0x90] sm:$0xff] %v883
    %1775 = vst [vmem:[%s21 + $0xa8] sm:$0xff] %v888
    %1776 = vst [vmem:[%s21 + $0x8] sm:$0xff] %v1236
    %1777 = vst [vmem:[%s21 + $0x20] sm:$0xff] %v1241
    %1778 = vst [vmem:[%s21 + $0x38] sm:$0xff] %v1246
    %1779 = vst [vmem:[%s21 + $0x50] sm:$0xff] %v1251
    %1780 = vst [vmem:[%s21 + $0x68] sm:$0xff] %v1256
    %1781 = vst [vmem:[%s21 + $0x80] sm:$0xff] %v1261
    %1782 = vst [vmem:[%s21 + $0x98] sm:$0xff] %v1266
    %1783 = vst [vmem:[%s21 + $0xb0] sm:$0xff] %v1271
    %1784 = vst [vmem:[%s21 + $0x10] sm:$0xff] %v1730
    %1785 = vst [vmem:[%s21 + $0x28] sm:$0xff] %v1735
    %1786 = vst [vmem:[%s21 + $0x40] sm:$0xff] %v1740
    %1787 = vst [vmem:[%s21 + $0x58] sm:$0xff] %v1745
    %1788 = vst [vmem:[%s21 + $0x70] sm:$0xff] %v1750
    %1789 = vst [vmem:[%s21 + $0x88] sm:$0xff] %v1755
    %1790 = vst [vmem:[%s21 + $0xa0] sm:$0xff] %v1760
    %1791 = vst [vmem:[%s21 + $0xb8] sm:$0xff] %v1765
    // Predicated region
    $region102: #{icm_forward.1} parent=1 // pred_check
      _
    $region103: #{icm_forward.1} parent=1 // pred_check_branch
      %1793 = sbr.rel (0) target = $region105
    $region104: #{icm_forward.1} parent=1 // pred_region
      _
    $region105: #{icm_forward.1} parent=1 // pred_fallthru
      _
    // Predicated region
    $region106: #{icm_forward.1} parent=1 // pred_check
      _
    $region107: #{icm_forward.1} parent=1 // pred_check_branch
      %1795 = sbr.rel (0) target = $region109
    $region108: #{icm_forward.1} parent=1 // pred_region
      _
    $region109: #{icm_forward.1} parent=1 // pred_fallthru
      _
    %1796 = vsyncpa [#allocation3], 1
    %1797 = vsyncpa [#allocation5], 1
    %1798 = vsyncpa [#allocation8], 1

</llo_original>
